<compile_context>
chip_gen: v5e
topology: v5e:2x2
jax: 0.10.0
libtpu: 0.0.40
codegen_flags: <defaults>
</compile_context>

<pallas_src>
import functools

import jax
import jax.numpy as jnp
from jax import lax
from jax.experimental import pallas as pl
from jax.experimental.pallas import tpu as pltpu


def _convlstm_kernel(xh_ref, w_ref, mask_ref, c_ref, *rest,
                     Ch, H, W, K, use_peephole):
    """Fused ConvLSTM cell update for one batch tile.

    xh_ref   : (Bt, Ctot_pad, HW)   [x | h | 1 | 0] activations (act_dtype)
    w_ref    : (K*K, 4*Ch, Ctot_pad) per-tap folded gate weights (f32);
               gate order [i|f|c|o] along axis 1; the bias lives in channel
               column Cin+Ch of the center tap only.
    mask_ref : (K*K, 1, HW)          0/1 border masks per tap (f32)
    c_ref    : (Bt, Ch, HW)          previous cell state (f32)
    [wci_ref, wcf_ref, wco_ref] : (1, Ch, HW) peephole weights (only if used)
    ch_ref, cc_ref : (Bt, Ch, HW)    outputs (new hidden, new cell)
    """
    if use_peephole:
        wci_ref, wcf_ref, wco_ref, ch_ref, cc_ref = rest
    else:
        ch_ref, cc_ref = rest

    Bt = xh_ref.shape[0]
    HW = xh_ref.shape[2]
    p = (K - 1) // 2

    for b in range(Bt):
        # Upcast once; all in-kernel math stays f32 (v5e VPU/EUP requirement).
        xh = xh_ref[b].astype(jnp.float32)            # (Ctot_pad, HW)

        # In-VMEM im2col: for tap (ky, kx) the window value at flat position
        # l = r*W + c is xh[:, l + dy*W + dx] (dy=ky-p, dx=kx-p) when the
        # shifted (r+dy, c+dx) lies inside the image, else 0.  The lane roll
        # realizes the shift (XLU); the 0/1 mask kills row wrap-around and
        # out-of-image rows/cols (VPU); each tap feeds one small MXU matmul
        # accumulated in f32 (bias arrives via the constant-1 channel).
        gates = None                                  # (4*Ch, HW) f32
        for ky in range(K):
            for kx in range(K):
                dy = ky - p
                dx = kx - p
                k = ky * K + kx
                if dy == 0 and dx == 0:
                    win = xh                          # center tap: no shift/mask
                else:
                    s = dy * W + dx
                    win = pltpu.roll(xh, shift=(-s) % HW, axis=1)
                    win = win * mask_ref[k]           # (1, HW) sublane bcast
                contrib = jnp.dot(w_ref[k], win,
                                  preferred_element_type=jnp.float32)
                gates = contrib if gates is None else gates + contrib

        # Gate slices at offsets that are multiples of Ch.  Ch % 8 == 0 keeps
        # them sublane-tile aligned (fast path); other Ch stay correct.
        gi = gates[0 * Ch:1 * Ch]
        gf = gates[1 * Ch:2 * Ch]
        gc = gates[2 * Ch:3 * Ch]
        go = gates[3 * Ch:4 * Ch]

        c_prev = c_ref[b]                             # (Ch, HW) f32
        if use_peephole:
            gi = gi + c_prev * wci_ref[0]
            gf = gf + c_prev * wcf_ref[0]
        ci = jax.nn.sigmoid(gi)
        cf = jax.nn.sigmoid(gf)
        cc = cf * c_prev + ci * jnp.tanh(gc)
        if use_peephole:
            go = go + cc * wco_ref[0]
        co = jax.nn.sigmoid(go)

        ch_ref[b] = (co * jnp.tanh(cc)).astype(ch_ref.dtype)
        cc_ref[b] = cc


def _round_up(n, m):
    return ((n + m - 1) // m) * m


def prepare_convlstm_params(Wx_list, Wh_list, bx_list):
    """Fold the 8 conv weights (+4 biases) into one (K*K, 4*Ch, Ctot_pad) tensor.

    Hoisted out of the per-step wrapper: call once, reuse across timesteps.
    Layout: axis 0 = conv tap k = ky*K + kx; axis 1 = gates [i|f|c|o] x Ch;
    axis 2 = channel slots [x (Cin) | h (Ch) | bias(=1) | zero pad].  The bias
    column is nonzero only for the CENTER tap, pairing with the constant-1
    channel the wrapper appends to the activations (bias folded into the MXU
    contraction).  Torch weights come in OIHW: (Ch, Cin_or_Ch, K, K).
    """
    Ch, Cin, K, _ = Wx_list[0].shape
    Ctot = Cin + Ch
    Ctot_pad = _round_up(Ctot + 1, 8)            # +1 bias slot, 8-sublane grain

    per_gate = [jnp.concatenate([wx, wh], axis=1)          # (Ch, Ctot, K, K)
                for wx, wh in zip(Wx_list, Wh_list)]
    w_all = jnp.concatenate(per_gate, axis=0)              # (4Ch, Ctot, K, K)
    w_taps = jnp.transpose(w_all, (2, 3, 0, 1)).reshape(K * K, 4 * Ch, Ctot)

    w_pad = jnp.zeros((K * K, 4 * Ch, Ctot_pad), jnp.float32)
    w_pad = w_pad.at[:, :, :Ctot].set(w_taps.astype(jnp.float32))
    bias = jnp.concatenate(bx_list, axis=0).astype(jnp.float32)   # (4Ch,)
    p = (K - 1) // 2
    w_pad = w_pad.at[p * K + p, :, Ctot].set(bias)         # bias -> center tap
    return w_pad, K, Ctot_pad


def convlstm_cell_forward(x, h, c, w_taps, K, Ctot_pad,
                          Wci=None, Wcf=None, Wco=None,
                          act_dtype=jnp.float32,
                          hidden_out_dtype=jnp.float32,
                          batch_tile=1,
                          vmem_limit_bytes=None):
    """ConvLSTMCell.forward.  x/h/c are NCHW; returns (ch, cc) in NCHW.

    w_taps/K/Ctot_pad come from prepare_convlstm_params (done once per model).
    Pass Wci/Wcf/Wco=None to statically skip the peephole terms (the
    init_hidden() case, where they are zeros).  act_dtype only controls the
    HBM/VMEM storage of the activation stream (bf16 halves the dominant DMA);
    all in-kernel math is f32, so the cell-state recurrence stays exact.
    """
    B, Cin, H, W = x.shape
    Ch = c.shape[1]
    HW = H * W
    Ctot = Cin + Ch
    KK = K * K
    p = (K - 1) // 2
    use_peephole = Wci is not None

    assert w_taps.shape == (KK, 4 * Ch, Ctot_pad)
    assert Ctot_pad >= Ctot + 1
    assert B % batch_tile == 0, "batch_tile must divide the batch size"

    # Activations shipped ONCE: [x | h | 1 (bias lane) | 0 pad], flattened
    # NCHW, built directly in act_dtype (no f32 intermediate on bf16 path).
    parts = [x.reshape(B, Cin, HW).astype(act_dtype),
             h.reshape(B, Ch, HW).astype(act_dtype),
             jnp.ones((B, 1, HW), act_dtype)]
    if Ctot_pad > Ctot + 1:
        parts.append(jnp.zeros((B, Ctot_pad - Ctot - 1, HW), act_dtype))
    xh = jnp.concatenate(parts, axis=1)                    # (B, Ctot_pad, HW)

    c_flat = c.reshape(B, Ch, HW).astype(jnp.float32)

    # Static 0/1 border masks per conv tap (constant-folded under jit; tiny
    # compared with the activation stream).
    lane = jnp.arange(HW, dtype=jnp.int32)
    row = lane // W
    colv = lane % W
    masks = []
    for ky in range(K):
        for kx in range(K):
            dy, dx = ky - p, kx - p
            masks.append((colv + dx >= 0) & (colv + dx < W) &
                         (row + dy >= 0) & (row + dy < H))
    tap_mask = jnp.stack(masks).astype(jnp.float32).reshape(KK, 1, HW)

    kernel = functools.partial(_convlstm_kernel, Ch=Ch, H=H, W=W, K=K,
                               use_peephole=use_peephole)

    in_specs = [
        pl.BlockSpec((batch_tile, Ctot_pad, HW), lambda b: (b, 0, 0)),
        pl.BlockSpec((KK, 4 * Ch, Ctot_pad), lambda b: (0, 0, 0)),
        pl.BlockSpec((KK, 1, HW), lambda b: (0, 0, 0)),
        pl.BlockSpec((batch_tile, Ch, HW), lambda b: (b, 0, 0)),
    ]
    inputs = [xh, w_taps.astype(jnp.float32), tap_mask, c_flat]
    if use_peephole:
        for wpeep in (Wci, Wcf, Wco):
            in_specs.append(pl.BlockSpec((1, Ch, HW), lambda b: (0, 0, 0)))
            inputs.append(wpeep.reshape(1, Ch, HW).astype(jnp.float32))

    grid_spec = pltpu.PrefetchScalarGridSpec(
        num_scalar_prefetch=0,
        # batch_tile elements per grid step amortize per-step overhead;
        # "parallel" lets megacore parts shard the batch axis.
        grid=(B // batch_tile,),
        in_specs=in_specs,
        out_specs=(
            pl.BlockSpec((batch_tile, Ch, HW), lambda b: (b, 0, 0)),
            pl.BlockSpec((batch_tile, Ch, HW), lambda b: (b, 0, 0)),
        ),
    )

    ch_flat, cc_flat = pl.pallas_call(
        kernel,
        out_shape=(jax.ShapeDtypeStruct((B, Ch, HW), hidden_out_dtype),
                   jax.ShapeDtypeStruct((B, Ch, HW), jnp.float32)),
        grid_spec=grid_spec,
        compiler_params=pltpu.CompilerParams(
            dimension_semantics=("parallel",),
            vmem_limit_bytes=vmem_limit_bytes),
    )(*inputs)

    # Contiguous reshape only -- no transpose back.
    return ch_flat.reshape(B, Ch, H, W), cc_flat.reshape(B, Ch, H, W)


def _reference_forward(x, h, c, Wx_list, Wh_list, bx_list, Wci, Wcf, Wco):
    """Plain-JAX replica of the PyTorch forward (NCHW) for validation."""
    K = Wx_list[0].shape[2]
    p = (K - 1) // 2

    def conv(inp, wm, b=None):
        out = lax.conv_general_dilated(
            inp, wm, (1, 1), [(p, p), (p, p)],
            dimension_numbers=('NCHW', 'OIHW', 'NCHW'))
        if b is not None:
            out = out + b[None, :, None, None]
        return out

    Wxi, Wxf, Wxc, Wxo = Wx_list
    Whi, Whf, Whc, Who = Wh_list
    bxi, bxf, bxc, bxo = bx_list
    ci = jax.nn.sigmoid(conv(x, Wxi, bxi) + conv(h, Whi) + c * Wci)
    cf = jax.nn.sigmoid(conv(x, Wxf, bxf) + conv(h, Whf) + c * Wcf)
    cc = cf * c + ci * jnp.tanh(conv(x, Wxc, bxc) + conv(h, Whc))
    co = jax.nn.sigmoid(conv(x, Wxo, bxo) + conv(h, Who) + cc * Wco)
    ch = co * jnp.tanh(cc)
    return ch, cc


if __name__ == "__main__":
    # Small shapes consistent with the module's forward.
    B, Cin, Ch, H, W, K = 2, 4, 8, 16, 16, 3

    key = jax.random.PRNGKey(0)
    keys = jax.random.split(key, 20)

    def mk(k, shape, scale=0.1):
        return jax.random.normal(k, shape, jnp.float32) * scale

    # Deterministic synthetic parameters (same shapes as the nn.Conv2d layers).
    Wxi, Whi = mk(keys[0], (Ch, Cin, K, K)), mk(keys[1], (Ch, Ch, K, K))
    Wxf, Whf = mk(keys[2], (Ch, Cin, K, K)), mk(keys[3], (Ch, Ch, K, K))
    Wxc, Whc = mk(keys[4], (Ch, Cin, K, K)), mk(keys[5], (Ch, Ch, K, K))
    Wxo, Who = mk(keys[6], (Ch, Cin, K, K)), mk(keys[7], (Ch, Ch, K, K))
    bxi, bxf = mk(keys[8], (Ch,)), mk(keys[9], (Ch,))
    bxc, bxo = mk(keys[10], (Ch,)), mk(keys[11], (Ch,))

    x = jax.random.normal(keys[12], (B, Cin, H, W), jnp.float32)
    h = jax.random.normal(keys[13], (B, Ch, H, W), jnp.float32)
    c = jax.random.normal(keys[14], (B, Ch, H, W), jnp.float32)

    Wx_list = [Wxi, Wxf, Wxc, Wxo]
    Wh_list = [Whi, Whf, Whc, Who]
    bx_list = [bxi, bxf, bxc, bxo]

    # One-time weight folding (bias folded in, channel axis padded to 8).
    w_taps, Kp, Ctot_pad = prepare_convlstm_params(Wx_list, Wh_list, bx_list)

    # --- Path 1: peephole path, f32 activation stream, batch_tile=1,
    #             explicit VMEM budget, tight check. --------------------------
    Wci = mk(keys[15], (1, Ch, H, W))
    Wcf = mk(keys[16], (1, Ch, H, W))
    Wco = mk(keys[17], (1, Ch, H, W))
    ch1, cc1 = convlstm_cell_forward(
        x, h, c, w_taps, Kp, Ctot_pad, Wci, Wcf, Wco,
        act_dtype=jnp.float32, batch_tile=1,
        vmem_limit_bytes=32 * 1024 * 1024)
    jax.block_until_ready((ch1, cc1))
    ch1_ref, cc1_ref = _reference_forward(x, h, c, Wx_list, Wh_list, bx_list,
                                          Wci, Wcf, Wco)
    assert ch1.shape == (B, Ch, H, W) and cc1.shape == (B, Ch, H, W)
    assert jnp.allclose(ch1, ch1_ref, atol=1e-4, rtol=1e-4)
    assert jnp.allclose(cc1, cc1_ref, atol=1e-4, rtol=1e-4)

    # --- Path 2: init_hidden() case (zero peepholes -> statically removed),
    #             bf16 activation stream, whole batch per grid step. ----------
    ch2, cc2 = convlstm_cell_forward(
        x, h, c, w_taps, Kp, Ctot_pad,
        act_dtype=jnp.bfloat16, batch_tile=B)
    jax.block_until_ready((ch2, cc2))
    zeros = jnp.zeros((1, Ch, H, W), jnp.float32)
    ch2_ref, cc2_ref = _reference_forward(x, h, c, Wx_list, Wh_list, bx_list,
                                          zeros, zeros, zeros)
    assert jnp.allclose(ch2, ch2_ref, atol=5e-2, rtol=5e-2)
    assert jnp.allclose(cc2, cc2_ref, atol=5e-2, rtol=5e-2)

    print("KERNEL_OK")
</pallas_src>

<mosaic_0001>
module attributes {stable_mosaic.version = 11 : i64} {
  func.func @_convlstm_kernel(%arg0: i32, %arg1: memref<1x16x256xf32, #tpu.memory_space<vmem>>, %arg2: memref<9x32x16xf32, #tpu.memory_space<vmem>>, %arg3: memref<9x1x256xf32, #tpu.memory_space<vmem>>, %arg4: memref<1x8x256xf32, #tpu.memory_space<vmem>>, %arg5: memref<1x8x256xf32, #tpu.memory_space<vmem>>, %arg6: memref<1x8x256xf32, #tpu.memory_space<vmem>>, %arg7: memref<1x8x256xf32, #tpu.memory_space<vmem>>, %arg8: memref<1x8x256xf32, #tpu.memory_space<vmem>>, %arg9: memref<1x8x256xf32, #tpu.memory_space<vmem>>) attributes {dimension_semantics = [#tpu.dimension_semantics<parallel>], iteration_bounds = array<i64: 2>, scalar_prefetch = 0 : i64, scratch_operands = 0 : i64, tpu.core_type = #tpu.core_type<tc>, window_params = [{transform_indices = @transform_0, window_bounds = array<i64: 1, 16, 256>}, {pipeline_mode = #tpu.pipeline_mode<synchronous>, transform_indices = @transform_1, window_bounds = array<i64: 9, 32, 16>}, {pipeline_mode = #tpu.pipeline_mode<synchronous>, transform_indices = @transform_2, window_bounds = array<i64: 9, 1, 256>}, {transform_indices = @transform_3, window_bounds = array<i64: 1, 8, 256>}, {pipeline_mode = #tpu.pipeline_mode<synchronous>, transform_indices = @transform_4, window_bounds = array<i64: 1, 8, 256>}, {pipeline_mode = #tpu.pipeline_mode<synchronous>, transform_indices = @transform_5, window_bounds = array<i64: 1, 8, 256>}, {pipeline_mode = #tpu.pipeline_mode<synchronous>, transform_indices = @transform_6, window_bounds = array<i64: 1, 8, 256>}, {transform_indices = @transform_7, window_bounds = array<i64: 1, 8, 256>}, {transform_indices = @transform_8, window_bounds = array<i64: 1, 8, 256>}]} {
    %c0 = arith.constant 0 : index
    %c0_0 = arith.constant 0 : index
    %c0_1 = arith.constant 0 : index
    %0 = vector.load %arg1[%c0, %c0_0, %c0_1] : memref<1x16x256xf32, #tpu.memory_space<vmem>>, vector<1x16x256xf32>
    %1 = vector.shape_cast %0 : vector<1x16x256xf32> to vector<16x256xf32>
    %c17_i32 = arith.constant 17 : i32
    %2 = tpu.dynamic_rotate %1 by %c17_i32 dim 1 : vector<16x256xf32>, i32 -> vector<16x256xf32>
    %c0_2 = arith.constant 0 : index
    %c0_3 = arith.constant 0 : index
    %c0_4 = arith.constant 0 : index
    %3 = vector.load %arg3[%c0_2, %c0_3, %c0_4] : memref<9x1x256xf32, #tpu.memory_space<vmem>>, vector<1x1x256xf32>
    %4 = vector.shape_cast %3 : vector<1x1x256xf32> to vector<1x256xf32>
    %5 = vector.broadcast %4 : vector<1x256xf32> to vector<16x256xf32>
    %6 = arith.mulf %2, %5 : vector<16x256xf32>
    %c0_5 = arith.constant 0 : index
    %c0_6 = arith.constant 0 : index
    %c0_7 = arith.constant 0 : index
    %7 = vector.load %arg2[%c0_5, %c0_6, %c0_7] : memref<9x32x16xf32, #tpu.memory_space<vmem>>, vector<1x32x16xf32>
    %8 = vector.shape_cast %7 : vector<1x32x16xf32> to vector<32x16xf32>
    %cst = arith.constant dense<0.000000e+00> : vector<32x256xf32>
    %9 = tpu.matmul %8, %6, %cst {dimension_numbers = #tpu.dot_dimension_numbers<[1], [0], [0], [1], [0, 0, 1, 1], [], []>} : vector<32x16xf32>, vector<16x256xf32>, vector<32x256xf32> -> vector<32x256xf32>
    %c16_i32 = arith.constant 16 : i32
    %10 = tpu.dynamic_rotate %1 by %c16_i32 dim 1 : vector<16x256xf32>, i32 -> vector<16x256xf32>
    %c1 = arith.constant 1 : index
    %c0_8 = arith.constant 0 : index
    %c0_9 = arith.constant 0 : index
    %11 = vector.load %arg3[%c1, %c0_8, %c0_9] : memref<9x1x256xf32, #tpu.memory_space<vmem>>, vector<1x1x256xf32>
    %12 = vector.shape_cast %11 : vector<1x1x256xf32> to vector<1x256xf32>
    %13 = vector.broadcast %12 : vector<1x256xf32> to vector<16x256xf32>
    %14 = arith.mulf %10, %13 : vector<16x256xf32>
    %c1_10 = arith.constant 1 : index
    %c0_11 = arith.constant 0 : index
    %c0_12 = arith.constant 0 : index
    %15 = vector.load %arg2[%c1_10, %c0_11, %c0_12] : memref<9x32x16xf32, #tpu.memory_space<vmem>>, vector<1x32x16xf32>
    %16 = vector.shape_cast %15 : vector<1x32x16xf32> to vector<32x16xf32>
    %cst_13 = arith.constant dense<0.000000e+00> : vector<32x256xf32>
    %17 = tpu.matmul %16, %14, %cst_13 {dimension_numbers = #tpu.dot_dimension_numbers<[1], [0], [0], [1], [0, 0, 1, 1], [], []>} : vector<32x16xf32>, vector<16x256xf32>, vector<32x256xf32> -> vector<32x256xf32>
    %18 = arith.addf %9, %17 : vector<32x256xf32>
    %c15_i32 = arith.constant 15 : i32
    %19 = tpu.dynamic_rotate %1 by %c15_i32 dim 1 : vector<16x256xf32>, i32 -> vector<16x256xf32>
    %c2 = arith.constant 2 : index
    %c0_14 = arith.constant 0 : index
    %c0_15 = arith.constant 0 : index
    %20 = vector.load %arg3[%c2, %c0_14, %c0_15] : memref<9x1x256xf32, #tpu.memory_space<vmem>>, vector<1x1x256xf32>
    %21 = vector.shape_cast %20 : vector<1x1x256xf32> to vector<1x256xf32>
    %22 = vector.broadcast %21 : vector<1x256xf32> to vector<16x256xf32>
    %23 = arith.mulf %19, %22 : vector<16x256xf32>
    %c2_16 = arith.constant 2 : index
    %c0_17 = arith.constant 0 : index
    %c0_18 = arith.constant 0 : index
    %24 = vector.load %arg2[%c2_16, %c0_17, %c0_18] : memref<9x32x16xf32, #tpu.memory_space<vmem>>, vector<1x32x16xf32>
    %25 = vector.shape_cast %24 : vector<1x32x16xf32> to vector<32x16xf32>
    %cst_19 = arith.constant dense<0.000000e+00> : vector<32x256xf32>
    %26 = tpu.matmul %25, %23, %cst_19 {dimension_numbers = #tpu.dot_dimension_numbers<[1], [0], [0], [1], [0, 0, 1, 1], [], []>} : vector<32x16xf32>, vector<16x256xf32>, vector<32x256xf32> -> vector<32x256xf32>
    %27 = arith.addf %18, %26 : vector<32x256xf32>
    %c1_i32 = arith.constant 1 : i32
    %28 = tpu.dynamic_rotate %1 by %c1_i32 dim 1 : vector<16x256xf32>, i32 -> vector<16x256xf32>
    %c3 = arith.constant 3 : index
    %c0_20 = arith.constant 0 : index
    %c0_21 = arith.constant 0 : index
    %29 = vector.load %arg3[%c3, %c0_20, %c0_21] : memref<9x1x256xf32, #tpu.memory_space<vmem>>, vector<1x1x256xf32>
    %30 = vector.shape_cast %29 : vector<1x1x256xf32> to vector<1x256xf32>
    %31 = vector.broadcast %30 : vector<1x256xf32> to vector<16x256xf32>
    %32 = arith.mulf %28, %31 : vector<16x256xf32>
    %c3_22 = arith.constant 3 : index
    %c0_23 = arith.constant 0 : index
    %c0_24 = arith.constant 0 : index
    %33 = vector.load %arg2[%c3_22, %c0_23, %c0_24] : memref<9x32x16xf32, #tpu.memory_space<vmem>>, vector<1x32x16xf32>
    %34 = vector.shape_cast %33 : vector<1x32x16xf32> to vector<32x16xf32>
    %cst_25 = arith.constant dense<0.000000e+00> : vector<32x256xf32>
    %35 = tpu.matmul %34, %32, %cst_25 {dimension_numbers = #tpu.dot_dimension_numbers<[1], [0], [0], [1], [0, 0, 1, 1], [], []>} : vector<32x16xf32>, vector<16x256xf32>, vector<32x256xf32> -> vector<32x256xf32>
    %36 = arith.addf %27, %35 : vector<32x256xf32>
    %c4 = arith.constant 4 : index
    %c0_26 = arith.constant 0 : index
    %c0_27 = arith.constant 0 : index
    %37 = vector.load %arg2[%c4, %c0_26, %c0_27] : memref<9x32x16xf32, #tpu.memory_space<vmem>>, vector<1x32x16xf32>
    %38 = vector.shape_cast %37 : vector<1x32x16xf32> to vector<32x16xf32>
    %cst_28 = arith.constant dense<0.000000e+00> : vector<32x256xf32>
    %39 = tpu.matmul %38, %1, %cst_28 {dimension_numbers = #tpu.dot_dimension_numbers<[1], [0], [0], [1], [0, 0, 1, 1], [], []>} : vector<32x16xf32>, vector<16x256xf32>, vector<32x256xf32> -> vector<32x256xf32>
    %40 = arith.addf %36, %39 : vector<32x256xf32>
    %c255_i32 = arith.constant 255 : i32
    %41 = tpu.dynamic_rotate %1 by %c255_i32 dim 1 : vector<16x256xf32>, i32 -> vector<16x256xf32>
    %c5 = arith.constant 5 : index
    %c0_29 = arith.constant 0 : index
    %c0_30 = arith.constant 0 : index
    %42 = vector.load %arg3[%c5, %c0_29, %c0_30] : memref<9x1x256xf32, #tpu.memory_space<vmem>>, vector<1x1x256xf32>
    %43 = vector.shape_cast %42 : vector<1x1x256xf32> to vector<1x256xf32>
    %44 = vector.broadcast %43 : vector<1x256xf32> to vector<16x256xf32>
    %45 = arith.mulf %41, %44 : vector<16x256xf32>
    %c5_31 = arith.constant 5 : index
    %c0_32 = arith.constant 0 : index
    %c0_33 = arith.constant 0 : index
    %46 = vector.load %arg2[%c5_31, %c0_32, %c0_33] : memref<9x32x16xf32, #tpu.memory_space<vmem>>, vector<1x32x16xf32>
    %47 = vector.shape_cast %46 : vector<1x32x16xf32> to vector<32x16xf32>
    %cst_34 = arith.constant dense<0.000000e+00> : vector<32x256xf32>
    %48 = tpu.matmul %47, %45, %cst_34 {dimension_numbers = #tpu.dot_dimension_numbers<[1], [0], [0], [1], [0, 0, 1, 1], [], []>} : vector<32x16xf32>, vector<16x256xf32>, vector<32x256xf32> -> vector<32x256xf32>
    %49 = arith.addf %40, %48 : vector<32x256xf32>
    %c241_i32 = arith.constant 241 : i32
    %50 = tpu.dynamic_rotate %1 by %c241_i32 dim 1 : vector<16x256xf32>, i32 -> vector<16x256xf32>
    %c6 = arith.constant 6 : index
    %c0_35 = arith.constant 0 : index
    %c0_36 = arith.constant 0 : index
    %51 = vector.load %arg3[%c6, %c0_35, %c0_36] : memref<9x1x256xf32, #tpu.memory_space<vmem>>, vector<1x1x256xf32>
    %52 = vector.shape_cast %51 : vector<1x1x256xf32> to vector<1x256xf32>
    %53 = vector.broadcast %52 : vector<1x256xf32> to vector<16x256xf32>
    %54 = arith.mulf %50, %53 : vector<16x256xf32>
    %c6_37 = arith.constant 6 : index
    %c0_38 = arith.constant 0 : index
    %c0_39 = arith.constant 0 : index
    %55 = vector.load %arg2[%c6_37, %c0_38, %c0_39] : memref<9x32x16xf32, #tpu.memory_space<vmem>>, vector<1x32x16xf32>
    %56 = vector.shape_cast %55 : vector<1x32x16xf32> to vector<32x16xf32>
    %cst_40 = arith.constant dense<0.000000e+00> : vector<32x256xf32>
    %57 = tpu.matmul %56, %54, %cst_40 {dimension_numbers = #tpu.dot_dimension_numbers<[1], [0], [0], [1], [0, 0, 1, 1], [], []>} : vector<32x16xf32>, vector<16x256xf32>, vector<32x256xf32> -> vector<32x256xf32>
    %58 = arith.addf %49, %57 : vector<32x256xf32>
    %c240_i32 = arith.constant 240 : i32
    %59 = tpu.dynamic_rotate %1 by %c240_i32 dim 1 : vector<16x256xf32>, i32 -> vector<16x256xf32>
    %c7 = arith.constant 7 : index
    %c0_41 = arith.constant 0 : index
    %c0_42 = arith.constant 0 : index
    %60 = vector.load %arg3[%c7, %c0_41, %c0_42] : memref<9x1x256xf32, #tpu.memory_space<vmem>>, vector<1x1x256xf32>
    %61 = vector.shape_cast %60 : vector<1x1x256xf32> to vector<1x256xf32>
    %62 = vector.broadcast %61 : vector<1x256xf32> to vector<16x256xf32>
    %63 = arith.mulf %59, %62 : vector<16x256xf32>
    %c7_43 = arith.constant 7 : index
    %c0_44 = arith.constant 0 : index
    %c0_45 = arith.constant 0 : index
    %64 = vector.load %arg2[%c7_43, %c0_44, %c0_45] : memref<9x32x16xf32, #tpu.memory_space<vmem>>, vector<1x32x16xf32>
    %65 = vector.shape_cast %64 : vector<1x32x16xf32> to vector<32x16xf32>
    %cst_46 = arith.constant dense<0.000000e+00> : vector<32x256xf32>
    %66 = tpu.matmul %65, %63, %cst_46 {dimension_numbers = #tpu.dot_dimension_numbers<[1], [0], [0], [1], [0, 0, 1, 1], [], []>} : vector<32x16xf32>, vector<16x256xf32>, vector<32x256xf32> -> vector<32x256xf32>
    %67 = arith.addf %58, %66 : vector<32x256xf32>
    %c239_i32 = arith.constant 239 : i32
    %68 = tpu.dynamic_rotate %1 by %c239_i32 dim 1 : vector<16x256xf32>, i32 -> vector<16x256xf32>
    %c8 = arith.constant 8 : index
    %c0_47 = arith.constant 0 : index
    %c0_48 = arith.constant 0 : index
    %69 = vector.load %arg3[%c8, %c0_47, %c0_48] : memref<9x1x256xf32, #tpu.memory_space<vmem>>, vector<1x1x256xf32>
    %70 = vector.shape_cast %69 : vector<1x1x256xf32> to vector<1x256xf32>
    %71 = vector.broadcast %70 : vector<1x256xf32> to vector<16x256xf32>
    %72 = arith.mulf %68, %71 : vector<16x256xf32>
    %c8_49 = arith.constant 8 : index
    %c0_50 = arith.constant 0 : index
    %c0_51 = arith.constant 0 : index
    %73 = vector.load %arg2[%c8_49, %c0_50, %c0_51] : memref<9x32x16xf32, #tpu.memory_space<vmem>>, vector<1x32x16xf32>
    %74 = vector.shape_cast %73 : vector<1x32x16xf32> to vector<32x16xf32>
    %cst_52 = arith.constant dense<0.000000e+00> : vector<32x256xf32>
    %75 = tpu.matmul %74, %72, %cst_52 {dimension_numbers = #tpu.dot_dimension_numbers<[1], [0], [0], [1], [0, 0, 1, 1], [], []>} : vector<32x16xf32>, vector<16x256xf32>, vector<32x256xf32> -> vector<32x256xf32>
    %76 = arith.addf %67, %75 : vector<32x256xf32>
    %77 = vector.extract_strided_slice %76 {offsets = [0, 0], sizes = [8, 256], strides = [1, 1]} : vector<32x256xf32> to vector<8x256xf32>
    %78 = vector.extract_strided_slice %76 {offsets = [8, 0], sizes = [8, 256], strides = [1, 1]} : vector<32x256xf32> to vector<8x256xf32>
    %79 = vector.extract_strided_slice %76 {offsets = [16, 0], sizes = [8, 256], strides = [1, 1]} : vector<32x256xf32> to vector<8x256xf32>
    %80 = vector.extract_strided_slice %76 {offsets = [24, 0], sizes = [8, 256], strides = [1, 1]} : vector<32x256xf32> to vector<8x256xf32>
    %c0_53 = arith.constant 0 : index
    %c0_54 = arith.constant 0 : index
    %c0_55 = arith.constant 0 : index
    %81 = vector.load %arg4[%c0_53, %c0_54, %c0_55] : memref<1x8x256xf32, #tpu.memory_space<vmem>>, vector<1x8x256xf32>
    %82 = vector.shape_cast %81 : vector<1x8x256xf32> to vector<8x256xf32>
    %c0_56 = arith.constant 0 : index
    %c0_57 = arith.constant 0 : index
    %c0_58 = arith.constant 0 : index
    %83 = vector.load %arg5[%c0_56, %c0_57, %c0_58] : memref<1x8x256xf32, #tpu.memory_space<vmem>>, vector<1x8x256xf32>
    %84 = vector.shape_cast %83 : vector<1x8x256xf32> to vector<8x256xf32>
    %85 = arith.mulf %82, %84 : vector<8x256xf32>
    %86 = arith.addf %77, %85 : vector<8x256xf32>
    %c0_59 = arith.constant 0 : index
    %c0_60 = arith.constant 0 : index
    %c0_61 = arith.constant 0 : index
    %87 = vector.load %arg6[%c0_59, %c0_60, %c0_61] : memref<1x8x256xf32, #tpu.memory_space<vmem>>, vector<1x8x256xf32>
    %88 = vector.shape_cast %87 : vector<1x8x256xf32> to vector<8x256xf32>
    %89 = arith.mulf %82, %88 : vector<8x256xf32>
    %90 = arith.addf %78, %89 : vector<8x256xf32>
    %91 = arith.negf %86 : vector<8x256xf32>
    %92 = math.exp %91 : vector<8x256xf32>
    %cst_62 = arith.constant 1.000000e+00 : f32
    %93 = vector.broadcast %cst_62 : f32 to vector<8x256xf32>
    %94 = arith.addf %93, %92 : vector<8x256xf32>
    %95 = arith.divf %93, %94 : vector<8x256xf32>
    %96 = arith.negf %90 : vector<8x256xf32>
    %97 = math.exp %96 : vector<8x256xf32>
    %cst_63 = arith.constant 1.000000e+00 : f32
    %98 = vector.broadcast %cst_63 : f32 to vector<8x256xf32>
    %99 = arith.addf %98, %97 : vector<8x256xf32>
    %100 = arith.divf %98, %99 : vector<8x256xf32>
    %101 = arith.mulf %100, %82 : vector<8x256xf32>
    %102 = math.tanh %79 : vector<8x256xf32>
    %103 = arith.mulf %95, %102 : vector<8x256xf32>
    %104 = arith.addf %101, %103 : vector<8x256xf32>
    %c0_64 = arith.constant 0 : index
    %c0_65 = arith.constant 0 : index
    %c0_66 = arith.constant 0 : index
    %105 = vector.load %arg7[%c0_64, %c0_65, %c0_66] : memref<1x8x256xf32, #tpu.memory_space<vmem>>, vector<1x8x256xf32>
    %106 = vector.shape_cast %105 : vector<1x8x256xf32> to vector<8x256xf32>
    %107 = arith.mulf %104, %106 : vector<8x256xf32>
    %108 = arith.addf %80, %107 : vector<8x256xf32>
    %109 = arith.negf %108 : vector<8x256xf32>
    %110 = math.exp %109 : vector<8x256xf32>
    %cst_67 = arith.constant 1.000000e+00 : f32
    %111 = vector.broadcast %cst_67 : f32 to vector<8x256xf32>
    %112 = arith.addf %111, %110 : vector<8x256xf32>
    %113 = arith.divf %111, %112 : vector<8x256xf32>
    %114 = math.tanh %104 : vector<8x256xf32>
    %115 = arith.mulf %113, %114 : vector<8x256xf32>
    %c0_68 = arith.constant 0 : index
    %c0_69 = arith.constant 0 : index
    %c0_70 = arith.constant 0 : index
    %116 = vector.load %arg8[%c0_68, %c0_69, %c0_70] : memref<1x8x256xf32, #tpu.memory_space<vmem>>, vector<1x8x256xf32>
    %117 = vector.shape_cast %116 : vector<1x8x256xf32> to vector<8x256xf32>
    %118 = vector.shape_cast %115 : vector<8x256xf32> to vector<1x8x256xf32>
    tpu.vector_store %arg8[%c0_68, %c0_69, %c0_70], %118 {strides = array<i32>} : memref<1x8x256xf32, #tpu.memory_space<vmem>>, vector<1x8x256xf32>,
    %c0_71 = arith.constant 0 : index
    %c0_72 = arith.constant 0 : index
    %c0_73 = arith.constant 0 : index
    %119 = vector.load %arg9[%c0_71, %c0_72, %c0_73] : memref<1x8x256xf32, #tpu.memory_space<vmem>>, vector<1x8x256xf32>
    %120 = vector.shape_cast %119 : vector<1x8x256xf32> to vector<8x256xf32>
    %121 = vector.shape_cast %104 : vector<8x256xf32> to vector<1x8x256xf32>
    tpu.vector_store %arg9[%c0_71, %c0_72, %c0_73], %121 {strides = array<i32>} : memref<1x8x256xf32, #tpu.memory_space<vmem>>, vector<1x8x256xf32>,
    return
  }
  func.func @transform_0(%arg0: i32) -> (i32, i32, i32) {
    %c0_i32 = arith.constant 0 : i32
    %c0_i32_0 = arith.constant 0 : i32
    %c0_i32_1 = arith.constant 0 : i32
    return %arg0, %c0_i32, %c0_i32_0 : i32, i32, i32
  }
  func.func @transform_1(%arg0: i32) -> (i32, i32, i32) {
    %c0_i32 = arith.constant 0 : i32
    %c0_i32_0 = arith.constant 0 : i32
    %c0_i32_1 = arith.constant 0 : i32
    %c0_i32_2 = arith.constant 0 : i32
    return %c0_i32, %c0_i32_0, %c0_i32_1 : i32, i32, i32
  }
  func.func @transform_2(%arg0: i32) -> (i32, i32, i32) {
    %c0_i32 = arith.constant 0 : i32
    %c0_i32_0 = arith.constant 0 : i32
    %c0_i32_1 = arith.constant 0 : i32
    %c0_i32_2 = arith.constant 0 : i32
    return %c0_i32, %c0_i32_0, %c0_i32_1 : i32, i32, i32
  }
  func.func @transform_3(%arg0: i32) -> (i32, i32, i32) {
    %c0_i32 = arith.constant 0 : i32
    %c0_i32_0 = arith.constant 0 : i32
    %c0_i32_1 = arith.constant 0 : i32
    return %arg0, %c0_i32, %c0_i32_0 : i32, i32, i32
  }
  func.func @transform_4(%arg0: i32) -> (i32, i32, i32) {
    %c0_i32 = arith.constant 0 : i32
    %c0_i32_0 = arith.constant 0 : i32
    %c0_i32_1 = arith.constant 0 : i32
    %c0_i32_2 = arith.constant 0 : i32
    return %c0_i32, %c0_i32_0, %c0_i32_1 : i32, i32, i32
  }
  func.func @transform_5(%arg0: i32) -> (i32, i32, i32) {
    %c0_i32 = arith.constant 0 : i32
    %c0_i32_0 = arith.constant 0 : i32
    %c0_i32_1 = arith.constant 0 : i32
    %c0_i32_2 = arith.constant 0 : i32
    return %c0_i32, %c0_i32_0, %c0_i32_1 : i32, i32, i32
  }
  func.func @transform_6(%arg0: i32) -> (i32, i32, i32) {
    %c0_i32 = arith.constant 0 : i32
    %c0_i32_0 = arith.constant 0 : i32
    %c0_i32_1 = arith.constant 0 : i32
    %c0_i32_2 = arith.constant 0 : i32
    return %c0_i32, %c0_i32_0, %c0_i32_1 : i32, i32, i32
  }
  func.func @transform_7(%arg0: i32) -> (i32, i32, i32) {
    %c0_i32 = arith.constant 0 : i32
    %c0_i32_0 = arith.constant 0 : i32
    %c0_i32_1 = arith.constant 0 : i32
    return %arg0, %c0_i32, %c0_i32_0 : i32, i32, i32
  }
  func.func @transform_8(%arg0: i32) -> (i32, i32, i32) {
    %c0_i32 = arith.constant 0 : i32
    %c0_i32_0 = arith.constant 0 : i32
    %c0_i32_1 = arith.constant 0 : i32
    return %arg0, %c0_i32, %c0_i32_0 : i32, i32, i32
  }
}

</mosaic_0001>

<llo_original>
// kernel: tpu_custom_call.1
$region0: #{tpu_custom_call.1}
  #allocation0 [shape = 'u32[]', space=smem, size = 0x4, offset = 0x4, fixed_abs, tag = 'smem constant byte address 0x4 - core index']
  #allocation1 [shape = 'u32[72,128]{1,0:T(1,128)}', space=vmem, size = 0x9000, scoped, tag = 'internal scratch']
  %s0 = inlined_call_operand.vmem [shape: f32[2,16,256], index: 0, kind: input, shape index: {}]
  %s1 = inlined_call_operand.vmem [shape: f32[9,32,16], index: 1, kind: input, shape index: {}]
  %s2 = inlined_call_operand.vmem [shape: f32[9,1,256], index: 2, kind: input, shape index: {}]
  %s3 = inlined_call_operand.vmem [shape: f32[2,8,256], index: 3, kind: input, shape index: {}]
  %s4 = inlined_call_operand.vmem [shape: f32[1,8,256], index: 4, kind: input, shape index: {}]
  %s5 = inlined_call_operand.vmem [shape: f32[1,8,256], index: 5, kind: input, shape index: {}]
  %s6 = inlined_call_operand.vmem [shape: f32[1,8,256], index: 6, kind: input, shape index: {}]
  %s7 = inlined_call_operand.hbm [shape: f32[2,8,256], index: 7, kind: output, shape index: {0}]
  %s8 = inlined_call_operand.hbm [shape: f32[2,8,256], index: 8, kind: output, shape index: {1}]
  %9 = xla_tuple %s7, %s8
  %s10 = sld [smem:[#allocation0]]
  $region69: #{tpu_custom_call.1} parent=0
    _
  %s12 = ssub.s32 1, %s10
  %s13 = scalar_select 0, %s12, %s10
  $region1: #{tpu_custom_call.1} parent=0
    #allocation2 [shape = 'u8[16384]{0}', space=vmem, size = 0x4000, scoped, tag = 'output window, operand 0']
    #allocation3 [shape = 's32[2]{0}', space=sflag, size = 0x8, scoped, tag = 'scoped memory for tpu_custom_call.1']
    #allocation4 [shape = 'u8[16384]{0}', space=vmem, size = 0x4000, scoped, tag = 'output window, operand 1']
    #allocation5 [shape = 's32[2]{0}', space=sflag, size = 0x8, scoped, tag = 'scoped memory for tpu_custom_call.1']
    %14 = vsyncpa [#allocation3], 0
    %s15 = scalar_lea.sflag [#allocation3], 1
    %16 = vsyncpa %s15, 0
    %17 = vsyncpa [#allocation5], 0
    %s18 = scalar_lea.sflag [#allocation5], 1
    %19 = vsyncpa %s18, 0
    loop: start=0, step=1, limit=4
    $region2: #{tpu_custom_call.1} parent=1 // loop_pre_header
      _
    $region3: #{tpu_custom_call.1} parent=1 // loop_header
      %s21 = sphi 0, %s25
      %p22 = scmp.ge.s32.totalorder %s21, 4
      %s31 = sphi 0, %s33
      %s34 = sphi 0, %s31
      %s35 = sphi 0, %s34
      %s51 = sphi 0, %s35
      %s55 = sphi 0, %s55
      %s57 = sphi 0, %s55
      %s58 = sphi 0, %s57
      %s72 = sphi 0, %s58
      %s76 = sphi 0, %s76
      %s78 = sphi 0, %s76
      %s79 = sphi 0, %s78
      %s93 = sphi 0, %s79
      %s99 = sphi 0, %s101
      %s102 = sphi 0, %s99
      %s103 = sphi 0, %s102
      %s119 = sphi 0, %s103
      %s123 = sphi 0, %s123
      %s125 = sphi 0, %s123
      %s126 = sphi 0, %s125
      %s140 = sphi 0, %s126
      %s144 = sphi 0, %s144
      %s146 = sphi 0, %s144
      %s147 = sphi 0, %s146
      %s161 = sphi 0, %s147
      %s165 = sphi 0, %s165
      %s167 = sphi 0, %s165
      %s168 = sphi 0, %s167
      %s182 = sphi 0, %s168
      %s188 = sphi 0, %s190
      %s191 = sphi 0, %s188
      %s192 = sphi 0, %s191
      %s208 = sphi 0, %s192
      %s214 = sphi 0, %s216
      %s217 = sphi 0, %s214
      %s218 = sphi 0, %s217
      %s234 = sphi 0, %s218
    $region4: #{tpu_custom_call.1} parent=1 // loop_header_branch
      %24 = sbr.rel (%p22) target = $region8
    $region5: #{tpu_custom_call.1} parent=1 // loop_body
      %s26 = ssub.s32 %s21, 1
      %s27 = ssub.s32 %s21, 2
      %s28 = sadd.s32 %s21, 1
      %s29 = ssub.s32 %s21, %s28
      %p30 = scmp.eq.s32.totalorder %s29, 0
      %s32 = sadd.s32 %s31, 1
      %s33 = scalar_select %p30, %s31, %s32
      %p36 = pneg %p30
      %p37 = scmp.eq.s32.totalorder %s21, 1
      %p38 = por %p36, %p37
      %p39 = scmp.ne.s32.totalorder %s31, %s34
      %p40 = scmp.eq.s32.totalorder %s21, 0
      %p41 = por %p39, %p40
      %p42 = scmp.ne.s32.totalorder %s31, %s34
      %p43 = scmp.eq.s32.totalorder %s26, 1
      %p44 = por %p42, %p43
      %p45 = scmp.ne.s32.totalorder %s34, %s35
      %p46 = scmp.eq.s32.totalorder %s26, 0
      %p47 = por %p45, %p46
      %p48 = scmp.ne.s32.totalorder %s34, %s35
      %p49 = scmp.eq.s32.totalorder %s27, 1
      %p50 = por %p48, %p49
      %p52 = scmp.ne.s32.totalorder %s35, %s51
      %p53 = scmp.eq.s32.totalorder %s27, 0
      %p54 = por %p52, %p53
      %s56 = sadd.s32 %s55, 1
      %p59 = scmp.eq.s32.totalorder %s21, 1
      %p60 = scmp.ne.s32.totalorder %s55, %s57
      %p61 = scmp.eq.s32.totalorder %s21, 0
      %p62 = por %p60, %p61
      %p63 = scmp.ne.s32.totalorder %s55, %s57
      %p64 = scmp.eq.s32.totalorder %s26, 1
      %p65 = por %p63, %p64
      %p66 = scmp.ne.s32.totalorder %s57, %s58
      %p67 = scmp.eq.s32.totalorder %s26, 0
      %p68 = por %p66, %p67
      %p69 = scmp.ne.s32.totalorder %s57, %s58
      %p70 = scmp.eq.s32.totalorder %s27, 1
      %p71 = por %p69, %p70
      %p73 = scmp.ne.s32.totalorder %s58, %s72
      %p74 = scmp.eq.s32.totalorder %s27, 0
      %p75 = por %p73, %p74
      %s77 = sadd.s32 %s76, 1
      %p80 = scmp.eq.s32.totalorder %s21, 1
      %p81 = scmp.ne.s32.totalorder %s76, %s78
      %p82 = scmp.eq.s32.totalorder %s21, 0
      %p83 = por %p81, %p82
      %p84 = scmp.ne.s32.totalorder %s76, %s78
      %p85 = scmp.eq.s32.totalorder %s26, 1
      %p86 = por %p84, %p85
      %p87 = scmp.ne.s32.totalorder %s78, %s79
      %p88 = scmp.eq.s32.totalorder %s26, 0
      %p89 = por %p87, %p88
      %p90 = scmp.ne.s32.totalorder %s78, %s79
      %p91 = scmp.eq.s32.totalorder %s27, 1
      %p92 = por %p90, %p91
      %p94 = scmp.ne.s32.totalorder %s79, %s93
      %p95 = scmp.eq.s32.totalorder %s27, 0
      %p96 = por %p94, %p95
      %s97 = ssub.s32 %s21, %s28
      %p98 = scmp.eq.s32.totalorder %s97, 0
      %s100 = sadd.s32 %s99, 1
      %s101 = scalar_select %p98, %s99, %s100
      %p104 = pneg %p98
      %p105 = scmp.eq.s32.totalorder %s21, 1
      %p106 = por %p104, %p105
      %p107 = scmp.ne.s32.totalorder %s99, %s102
      %p108 = scmp.eq.s32.totalorder %s21, 0
      %p109 = por %p107, %p108
      %p110 = scmp.ne.s32.totalorder %s99, %s102
      %p111 = scmp.eq.s32.totalorder %s26, 1
      %p112 = por %p110, %p111
      %p113 = scmp.ne.s32.totalorder %s102, %s103
      %p114 = scmp.eq.s32.totalorder %s26, 0
      %p115 = por %p113, %p114
      %p116 = scmp.ne.s32.totalorder %s102, %s103
      %p117 = scmp.eq.s32.totalorder %s27, 1
      %p118 = por %p116, %p117
      %p120 = scmp.ne.s32.totalorder %s103, %s119
      %p121 = scmp.eq.s32.totalorder %s27, 0
      %p122 = por %p120, %p121
      %s124 = sadd.s32 %s123, 1
      %p127 = scmp.eq.s32.totalorder %s21, 1
      %p128 = scmp.ne.s32.totalorder %s123, %s125
      %p129 = scmp.eq.s32.totalorder %s21, 0
      %p130 = por %p128, %p129
      %p131 = scmp.ne.s32.totalorder %s123, %s125
      %p132 = scmp.eq.s32.totalorder %s26, 1
      %p133 = por %p131, %p132
      %p134 = scmp.ne.s32.totalorder %s125, %s126
      %p135 = scmp.eq.s32.totalorder %s26, 0
      %p136 = por %p134, %p135
      %p137 = scmp.ne.s32.totalorder %s125, %s126
      %p138 = scmp.eq.s32.totalorder %s27, 1
      %p139 = por %p137, %p138
      %p141 = scmp.ne.s32.totalorder %s126, %s140
      %p142 = scmp.eq.s32.totalorder %s27, 0
      %p143 = por %p141, %p142
      %s145 = sadd.s32 %s144, 1
      %p148 = scmp.eq.s32.totalorder %s21, 1
      %p149 = scmp.ne.s32.totalorder %s144, %s146
      %p150 = scmp.eq.s32.totalorder %s21, 0
      %p151 = por %p149, %p150
      %p152 = scmp.ne.s32.totalorder %s144, %s146
      %p153 = scmp.eq.s32.totalorder %s26, 1
      %p154 = por %p152, %p153
      %p155 = scmp.ne.s32.totalorder %s146, %s147
      %p156 = scmp.eq.s32.totalorder %s26, 0
      %p157 = por %p155, %p156
      %p158 = scmp.ne.s32.totalorder %s146, %s147
      %p159 = scmp.eq.s32.totalorder %s27, 1
      %p160 = por %p158, %p159
      %p162 = scmp.ne.s32.totalorder %s147, %s161
      %p163 = scmp.eq.s32.totalorder %s27, 0
      %p164 = por %p162, %p163
      %s166 = sadd.s32 %s165, 1
      %p169 = scmp.eq.s32.totalorder %s21, 1
      %p170 = scmp.ne.s32.totalorder %s165, %s167
      %p171 = scmp.eq.s32.totalorder %s21, 0
      %p172 = por %p170, %p171
      %p173 = scmp.ne.s32.totalorder %s165, %s167
      %p174 = scmp.eq.s32.totalorder %s26, 1
      %p175 = por %p173, %p174
      %p176 = scmp.ne.s32.totalorder %s167, %s168
      %p177 = scmp.eq.s32.totalorder %s26, 0
      %p178 = por %p176, %p177
      %p179 = scmp.ne.s32.totalorder %s167, %s168
      %p180 = scmp.eq.s32.totalorder %s27, 1
      %p181 = por %p179, %p180
      %p183 = scmp.ne.s32.totalorder %s168, %s182
      %p184 = scmp.eq.s32.totalorder %s27, 0
      %p185 = por %p183, %p184
      %s186 = ssub.s32 %s21, %s28
      %p187 = scmp.eq.s32.totalorder %s186, 0
      %s189 = sadd.s32 %s188, 1
      %s190 = scalar_select %p187, %s188, %s189
      %p193 = pneg %p187
      %p194 = scmp.eq.s32.totalorder %s21, 1
      %p195 = por %p193, %p194
      %p196 = scmp.ne.s32.totalorder %s188, %s191
      %p197 = scmp.eq.s32.totalorder %s21, 0
      %p198 = por %p196, %p197
      %p199 = scmp.ne.s32.totalorder %s188, %s191
      %p200 = scmp.eq.s32.totalorder %s26, 1
      %p201 = por %p199, %p200
      %p202 = scmp.ne.s32.totalorder %s191, %s192
      %p203 = scmp.eq.s32.totalorder %s26, 0
      %p204 = por %p202, %p203
      %p205 = scmp.ne.s32.totalorder %s191, %s192
      %p206 = scmp.eq.s32.totalorder %s27, 1
      %p207 = por %p205, %p206
      %p209 = scmp.ne.s32.totalorder %s192, %s208
      %p210 = scmp.eq.s32.totalorder %s27, 0
      %p211 = por %p209, %p210
      %s212 = ssub.s32 %s21, %s28
      %p213 = scmp.eq.s32.totalorder %s212, 0
      %s215 = sadd.s32 %s214, 1
      %s216 = scalar_select %p213, %s214, %s215
      %p219 = pneg %p213
      %p220 = scmp.eq.s32.totalorder %s21, 1
      %p221 = por %p219, %p220
      %p222 = scmp.ne.s32.totalorder %s214, %s217
      %p223 = scmp.eq.s32.totalorder %s21, 0
      %p224 = por %p222, %p223
      %p225 = scmp.ne.s32.totalorder %s214, %s217
      %p226 = scmp.eq.s32.totalorder %s26, 1
      %p227 = por %p225, %p226
      %p228 = scmp.ne.s32.totalorder %s217, %s218
      %p229 = scmp.eq.s32.totalorder %s26, 0
      %p230 = por %p228, %p229
      %p231 = scmp.ne.s32.totalorder %s217, %s218
      %p232 = scmp.eq.s32.totalorder %s27, 1
      %p233 = por %p231, %p232
      %p235 = scmp.ne.s32.totalorder %s218, %s234
      %p236 = scmp.eq.s32.totalorder %s27, 0
      %p237 = por %p235, %p236
      %p238 = scmp.le.s32.totalorder 1, %s21
      %p239 = scmp.lt.s32.totalorder %s21, 3
      %p240 = pnand %p238, %p239
      %p241 = pneg %p240
      // Predicated region
      $region9: #{tpu_custom_call.1} parent=5 // pred_check
        _
      $region10: #{tpu_custom_call.1} parent=5 // pred_check_branch
        %243 = sbr.rel (%p240) target = $region12
      $region11: #{tpu_custom_call.1} parent=5 // pred_region
        %s244 = ssub.s32 %s21, 1
        // Predicated region
        $region13: #{tpu_custom_call.1} parent=11 // pred_check
          %p245 = pneg %p68
        $region14: #{tpu_custom_call.1} parent=11 // pred_check_branch
          %247 = sbr.rel (%p245) target = $region16
        $region15: #{tpu_custom_call.1} parent=11 // pred_region
          _
        $region16: #{tpu_custom_call.1} parent=11 // pred_fallthru
          _
        // Predicated region
        $region17: #{tpu_custom_call.1} parent=11 // pred_check
          %p248 = pneg %p89
        $region18: #{tpu_custom_call.1} parent=11 // pred_check_branch
          %250 = sbr.rel (%p248) target = $region20
        $region19: #{tpu_custom_call.1} parent=11 // pred_region
          _
        $region20: #{tpu_custom_call.1} parent=11 // pred_fallthru
          _
        // Predicated region
        $region21: #{tpu_custom_call.1} parent=11 // pred_check
          %p251 = pneg %p136
        $region22: #{tpu_custom_call.1} parent=11 // pred_check_branch
          %253 = sbr.rel (%p251) target = $region24
        $region23: #{tpu_custom_call.1} parent=11 // pred_region
          _
        $region24: #{tpu_custom_call.1} parent=11 // pred_fallthru
          _
        // Predicated region
        $region25: #{tpu_custom_call.1} parent=11 // pred_check
          %p254 = pneg %p157
        $region26: #{tpu_custom_call.1} parent=11 // pred_check_branch
          %256 = sbr.rel (%p254) target = $region28
        $region27: #{tpu_custom_call.1} parent=11 // pred_region
          _
        $region28: #{tpu_custom_call.1} parent=11 // pred_fallthru
          _
        // Predicated region
        $region29: #{tpu_custom_call.1} parent=11 // pred_check
          %p257 = pneg %p178
        $region30: #{tpu_custom_call.1} parent=11 // pred_check_branch
          %259 = sbr.rel (%p257) target = $region32
        $region31: #{tpu_custom_call.1} parent=11 // pred_region
          _
        $region32: #{tpu_custom_call.1} parent=11 // pred_fallthru
          _
      $region12: #{tpu_custom_call.1} parent=5 // pred_fallthru
        _
      %p260 = scmp.lt.s32.totalorder %s21, 2
      // Predicated region
      $region33: #{tpu_custom_call.1} parent=5 // pred_check
        %p261 = pneg %p260
      $region34: #{tpu_custom_call.1} parent=5 // pred_check_branch
        %263 = sbr.rel (%p261) target = $region36
      $region35: #{tpu_custom_call.1} parent=5 // pred_region
        // Predicated region
        $region37: #{tpu_custom_call.1} parent=35 // pred_check
          %p264 = pneg %p41
        $region38: #{tpu_custom_call.1} parent=35 // pred_check_branch
          %266 = sbr.rel (%p264) target = $region40
        $region39: #{tpu_custom_call.1} parent=35 // pred_region
          %p267 = scmp.lt.s32.totalorder %s21, 1
          %s268 = scalar_select %p267, %s21, 1
          %s269 = smul.addr %s268, 4
          %s270 = smul.addr %s269, 8
          %s271 = scalar_lea.vmem %s0, %s270
        $region40: #{tpu_custom_call.1} parent=35 // pred_fallthru
          _
        // Predicated region
        $region41: #{tpu_custom_call.1} parent=35 // pred_check
          %p272 = pneg %p109
        $region42: #{tpu_custom_call.1} parent=35 // pred_check_branch
          %274 = sbr.rel (%p272) target = $region44
        $region43: #{tpu_custom_call.1} parent=35 // pred_region
          %p275 = scmp.lt.s32.totalorder %s21, 1
          %s276 = scalar_select %p275, %s21, 1
          %s277 = smul.addr %s276, 2
          %s278 = smul.addr %s277, 8
          %s279 = scalar_lea.vmem %s3, %s278
        $region44: #{tpu_custom_call.1} parent=35 // pred_fallthru
          _
      $region36: #{tpu_custom_call.1} parent=5 // pred_fallthru
        _
      %p280 = scmp.le.s32.totalorder 1, %s21
      %p281 = scmp.lt.s32.totalorder %s21, 3
      %p282 = pnand %p280, %p281
      %p283 = pneg %p282
      // Predicated region
      $region45: #{tpu_custom_call.1} parent=5 // pred_check
        _
      $region46: #{tpu_custom_call.1} parent=5 // pred_check_branch
        %285 = sbr.rel (%p282) target = $region48
      $region47: #{tpu_custom_call.1} parent=5 // pred_region
        %s286 = ssub.s32 %s21, 1
        %p287 = scmp.lt.s32.totalorder %s26, 1
        %s288 = scalar_select %p287, %s26, 1
        %s289 = smul.addr %s288, 4
        %s290 = smul.addr %s289, 8
        %s291 = scalar_lea.vmem %s0, %s290
        %p292 = pneg %p47
        %p293 = pneg %p44
        %p294 = pneg %p68
        %p295 = pneg %p65
        %p296 = pneg %p89
        %p297 = pneg %p86
        %p298 = scmp.lt.s32.totalorder %s26, 1
        %s299 = scalar_select %p298, %s26, 1
        %s300 = smul.addr %s299, 2
        %s301 = smul.addr %s300, 8
        %s302 = scalar_lea.vmem %s3, %s301
        %p303 = pneg %p115
        %p304 = pneg %p112
        %p305 = pneg %p136
        %p306 = pneg %p133
        %p307 = pneg %p157
        %p308 = pneg %p154
        %p309 = pneg %p178
        %p310 = pneg %p175
        %p311 = pneg %p204
        %p312 = pneg %p201
        %s313 = sand.u32 %s191, 1
        %s314 = scalar_lea.sflag [#allocation3], %s313
        %s315 = sand.u32 %s191, 1
        %s316 = smul.addr %s315, 16
        %s317 = scalar_lea.vmem [#allocation2], %s316
        %p318 = pneg %p230
        %p319 = pneg %p227
        %s320 = sand.u32 %s217, 1
        %s321 = scalar_lea.sflag [#allocation5], %s320
        %s322 = sand.u32 %s217, 1
        %s323 = smul.addr %s322, 16
        %s324 = scalar_lea.vmem [#allocation4], %s323
        %p325 = scmp.lt.s32.totalorder %s26, 1
        %s326 = scalar_select %p325, %s26, 1
        %s327 = smul.addr %s326, 4
        %s328 = smul.addr %s327, 8
        %s329 = scalar_lea.vmem %s0, %s328
        %p330 = scmp.lt.s32.totalorder %s26, 1
        %s331 = scalar_select %p330, %s26, 1
        %s332 = smul.addr %s331, 2
        %s333 = smul.addr %s332, 8
        %s334 = scalar_lea.vmem %s3, %s333
        %v335 = vld [vmem:[%s329] sm:$0xff]
        %v336 = vld [vmem:[%s329 + $0x8] sm:$0xff]
        %v337 = vld [vmem:[%s329 + $0x10] sm:$0xff]
        %v338 = vld [vmem:[%s329 + $0x18] sm:$0xff]
        %339 = vrot.lane.b32.xlu0 %v335, 17
        %v340 = vpop.permute.xlu0 %339
        %341 = vrot.lane.b32.xlu0 %v337, 17
        %v342 = vpop.permute.xlu0 %341
        %343 = vrot.lane.b32.xlu0 %v336, 17
        %v344 = vpop.permute.xlu0 %343
        %345 = vrot.lane.b32.xlu0 %v338, 17
        %v346 = vpop.permute.xlu0 %345
        %v347 = vlaneseq
        %v348 = vand.u32 %v347, 127
        %vm349 = vcmp.lt.s32.totalorder %v348, 17
        %v350 = vsel %vm349, %v340, %v344
        %v351 = vsel %vm349, %v342, %v346
        %v352 = vsel %vm349, %v344, %v340
        %v353 = vsel %vm349, %v346, %v342
        %v354 = vld [vmem:[%s2] sm:$0x3]
        %v356 = vperm.slane %v354, 0
        %v357 = vperm.slane %v354, 1
        %v360 = vmul.f32 %v352, %v356
        %v361 = vmul.f32 %v350, %v357
        %v362 = vmul.f32 %v353, %v356
        %v363 = vmul.f32 %v351, %v357
        %v364 = vld [vmem:[%s1] sm:$0xff]
        %v365 = vld [vmem:[%s1 + $0x8] sm:$0xff]
        %v366 = vld [vmem:[%s1 + $0x10] sm:$0xff]
        %v367 = vld [vmem:[%s1 + $0x18] sm:$0xff]
        %368 = vrot.lane.b32.xlu0 %v335, 16
        %v369 = vpop.permute.xlu0 %368
        %370 = vrot.lane.b32.xlu0 %v337, 16
        %v371 = vpop.permute.xlu0 %370
        %372 = vrot.lane.b32.xlu0 %v336, 16
        %v373 = vpop.permute.xlu0 %372
        %374 = vrot.lane.b32.xlu0 %v338, 16
        %v375 = vpop.permute.xlu0 %374
        %vm376 = vcmp.lt.s32.totalorder %v348, 16
        %v377 = vsel %vm376, %v369, %v373
        %v378 = vsel %vm376, %v371, %v375
        %v379 = vsel %vm376, %v373, %v369
        %v380 = vsel %vm376, %v375, %v371
        %s381 = scalar_lea.vmem %s2, 2
        %v382 = vld [vmem:[%s381] sm:$0x3]
        %v384 = vperm.slane %v382, 0
        %v385 = vperm.slane %v382, 1
        %v388 = vmul.f32 %v379, %v384
        %v389 = vmul.f32 %v377, %v385
        %v390 = vmul.f32 %v380, %v384
        %v391 = vmul.f32 %v378, %v385
        %s392 = scalar_lea.vmem %s1, 32
        %v393 = vld [vmem:[%s392] sm:$0xff]
        %v394 = vld [vmem:[%s392 + $0x8] sm:$0xff]
        %v395 = vld [vmem:[%s392 + $0x10] sm:$0xff]
        %v396 = vld [vmem:[%s392 + $0x18] sm:$0xff]
        %vm397 = vcmask 130048
        %v399 = vsel %vm397, %v393, 0
        %v402 = vsel %vm397, %v394, 0
        %v405 = vsel %vm397, %v395, 0
        %v408 = vsel %vm397, %v396, 0
        %410 = vmatpush.msra.mxu0 0.0
        %411 = vmatpush.msra.mxu0 0.0
        %412 = vmatpush.msra.mxu0 0.0
        %413 = vmatpush.msra.mxu0 0.0
        %414 = vmatpush.msra.mxu0 0.0
        %415 = vmatpush.msra.mxu0 0.0
        %416 = vmatpush.msra.mxu0 0.0
        %417 = vmatpush.msra.mxu0 0.0
        %418 = vmatpush.msra.mxu0 0.0
        %419 = vmatpush.msra.mxu0 0.0
        %420 = vmatpush.msra.mxu0 0.0
        %421 = vmatpush.msra.mxu0 0.0
        %422 = vmatpush.msra.mxu0 0.0
        %423 = vmatpush.msra.mxu0 0.0
        %424 = vmatpush.msra.mxu0 %v390
        %425 = vmatpush.msra.mxu0 %v388
        %426 = vmatmul.f32.gmra.mxu0 %v399
        %v427 = vpop.f32.mrf.mxu0
        %v428 = vadd.f32 0.0, %v427
        %429 = vmatmul.f32.gmra.mxu0 %v402
        %v430 = vpop.f32.mrf.mxu0
        %v431 = vadd.f32 0.0, %v430
        %432 = vmatmul.f32.gmra.mxu0 %v405
        %v433 = vpop.f32.mrf.mxu0
        %v434 = vadd.f32 0.0, %v433
        %435 = vmatmul.f32.gmra.mxu0 %v408
        %v436 = vpop.f32.mrf.mxu0
        %v437 = vadd.f32 0.0, %v436
        %438 = vdwg.mxu0
        %439 = vmatpush.msra.mxu0 0.0
        %440 = vmatpush.msra.mxu0 0.0
        %441 = vmatpush.msra.mxu0 0.0
        %442 = vmatpush.msra.mxu0 0.0
        %443 = vmatpush.msra.mxu0 0.0
        %444 = vmatpush.msra.mxu0 0.0
        %445 = vmatpush.msra.mxu0 0.0
        %446 = vmatpush.msra.mxu0 0.0
        %447 = vmatpush.msra.mxu0 0.0
        %448 = vmatpush.msra.mxu0 0.0
        %449 = vmatpush.msra.mxu0 0.0
        %450 = vmatpush.msra.mxu0 0.0
        %451 = vmatpush.msra.mxu0 0.0
        %452 = vmatpush.msra.mxu0 0.0
        %453 = vmatpush.msra.mxu0 %v391
        %454 = vmatpush.msra.mxu0 %v389
        %455 = vmatmul.f32.gmra.mxu0 %v399
        %v456 = vpop.f32.mrf.mxu0
        %v457 = vadd.f32 0.0, %v456
        %458 = vmatmul.f32.gmra.mxu0 %v402
        %v459 = vpop.f32.mrf.mxu0
        %v460 = vadd.f32 0.0, %v459
        %461 = vmatmul.f32.gmra.mxu0 %v405
        %v462 = vpop.f32.mrf.mxu0
        %v463 = vadd.f32 0.0, %v462
        %464 = vmatmul.f32.gmra.mxu0 %v408
        %v465 = vpop.f32.mrf.mxu0
        %v466 = vadd.f32 0.0, %v465
        %467 = vdwg.mxu0
        %v469 = vsel %vm397, %v364, 0
        %v472 = vsel %vm397, %v365, 0
        %v475 = vsel %vm397, %v366, 0
        %v478 = vsel %vm397, %v367, 0
        %480 = vmatpush.msra.mxu0 0.0
        %481 = vmatpush.msra.mxu0 0.0
        %482 = vmatpush.msra.mxu0 0.0
        %483 = vmatpush.msra.mxu0 0.0
        %484 = vmatpush.msra.mxu0 0.0
        %485 = vmatpush.msra.mxu0 0.0
        %486 = vmatpush.msra.mxu0 0.0
        %487 = vmatpush.msra.mxu0 0.0
        %488 = vmatpush.msra.mxu0 0.0
        %489 = vmatpush.msra.mxu0 0.0
        %490 = vmatpush.msra.mxu0 0.0
        %491 = vmatpush.msra.mxu0 0.0
        %492 = vmatpush.msra.mxu0 0.0
        %493 = vmatpush.msra.mxu0 0.0
        %494 = vmatpush.msra.mxu0 %v362
        %495 = vmatpush.msra.mxu0 %v360
        %496 = vmatmul.f32.gmra.mxu0 %v469
        %v497 = vpop.f32.mrf.mxu0
        %v498 = vadd.f32 %v428, %v497
        %499 = vmatmul.f32.gmra.mxu0 %v472
        %v500 = vpop.f32.mrf.mxu0
        %v501 = vadd.f32 %v431, %v500
        %502 = vmatmul.f32.gmra.mxu0 %v475
        %v503 = vpop.f32.mrf.mxu0
        %v504 = vadd.f32 %v434, %v503
        %505 = vmatmul.f32.gmra.mxu0 %v478
        %v506 = vpop.f32.mrf.mxu0
        %v507 = vadd.f32 %v437, %v506
        %508 = vdwg.mxu0
        %509 = vmatpush.msra.mxu0 0.0
        %510 = vmatpush.msra.mxu0 0.0
        %511 = vmatpush.msra.mxu0 0.0
        %512 = vmatpush.msra.mxu0 0.0
        %513 = vmatpush.msra.mxu0 0.0
        %514 = vmatpush.msra.mxu0 0.0
        %515 = vmatpush.msra.mxu0 0.0
        %516 = vmatpush.msra.mxu0 0.0
        %517 = vmatpush.msra.mxu0 0.0
        %518 = vmatpush.msra.mxu0 0.0
        %519 = vmatpush.msra.mxu0 0.0
        %520 = vmatpush.msra.mxu0 0.0
        %521 = vmatpush.msra.mxu0 0.0
        %522 = vmatpush.msra.mxu0 0.0
        %523 = vmatpush.msra.mxu0 %v363
        %524 = vmatpush.msra.mxu0 %v361
        %525 = vmatmul.f32.gmra.mxu0 %v469
        %v526 = vpop.f32.mrf.mxu0
        %v527 = vadd.f32 %v457, %v526
        %528 = vmatmul.f32.gmra.mxu0 %v472
        %v529 = vpop.f32.mrf.mxu0
        %v530 = vadd.f32 %v460, %v529
        %531 = vmatmul.f32.gmra.mxu0 %v475
        %v532 = vpop.f32.mrf.mxu0
        %v533 = vadd.f32 %v463, %v532
        %534 = vmatmul.f32.gmra.mxu0 %v478
        %v535 = vpop.f32.mrf.mxu0
        %v536 = vadd.f32 %v466, %v535
        %537 = vdwg.mxu0
        %538 = vrot.lane.b32.xlu0 %v335, 15
        %v539 = vpop.permute.xlu0 %538
        %540 = vrot.lane.b32.xlu0 %v337, 15
        %v541 = vpop.permute.xlu0 %540
        %542 = vrot.lane.b32.xlu0 %v336, 15
        %v543 = vpop.permute.xlu0 %542
        %544 = vrot.lane.b32.xlu0 %v338, 15
        %v545 = vpop.permute.xlu0 %544
        %vm546 = vcmp.lt.s32.totalorder %v348, 15
        %v547 = vsel %vm546, %v539, %v543
        %v548 = vsel %vm546, %v541, %v545
        %v549 = vsel %vm546, %v543, %v539
        %v550 = vsel %vm546, %v545, %v541
        %s551 = scalar_lea.vmem %s2, 4
        %v552 = vld [vmem:[%s551] sm:$0x3]
        %v554 = vperm.slane %v552, 0
        %v555 = vperm.slane %v552, 1
        %v558 = vmul.f32 %v549, %v554
        %v559 = vmul.f32 %v547, %v555
        %v560 = vmul.f32 %v550, %v554
        %v561 = vmul.f32 %v548, %v555
        %s562 = scalar_lea.vmem %s1, 64
        %v563 = vld [vmem:[%s562] sm:$0xff]
        %v564 = vld [vmem:[%s562 + $0x8] sm:$0xff]
        %v565 = vld [vmem:[%s562 + $0x10] sm:$0xff]
        %v566 = vld [vmem:[%s562 + $0x18] sm:$0xff]
        %v568 = vsel %vm397, %v563, 0
        %v571 = vsel %vm397, %v564, 0
        %v574 = vsel %vm397, %v565, 0
        %v577 = vsel %vm397, %v566, 0
        %579 = vmatpush.msra.mxu0 0.0
        %580 = vmatpush.msra.mxu0 0.0
        %581 = vmatpush.msra.mxu0 0.0
        %582 = vmatpush.msra.mxu0 0.0
        %583 = vmatpush.msra.mxu0 0.0
        %584 = vmatpush.msra.mxu0 0.0
        %585 = vmatpush.msra.mxu0 0.0
        %586 = vmatpush.msra.mxu0 0.0
        %587 = vmatpush.msra.mxu0 0.0
        %588 = vmatpush.msra.mxu0 0.0
        %589 = vmatpush.msra.mxu0 0.0
        %590 = vmatpush.msra.mxu0 0.0
        %591 = vmatpush.msra.mxu0 0.0
        %592 = vmatpush.msra.mxu0 0.0
        %593 = vmatpush.msra.mxu0 %v560
        %594 = vmatpush.msra.mxu0 %v558
        %595 = vmatmul.f32.gmra.mxu0 %v568
        %v596 = vpop.f32.mrf.mxu0
        %v597 = vadd.f32 0.0, %v596
        %598 = vmatmul.f32.gmra.mxu0 %v571
        %v599 = vpop.f32.mrf.mxu0
        %v600 = vadd.f32 0.0, %v599
        %601 = vmatmul.f32.gmra.mxu0 %v574
        %v602 = vpop.f32.mrf.mxu0
        %v603 = vadd.f32 0.0, %v602
        %604 = vmatmul.f32.gmra.mxu0 %v577
        %v605 = vpop.f32.mrf.mxu0
        %v606 = vadd.f32 0.0, %v605
        %607 = vdwg.mxu0
        %608 = vmatpush.msra.mxu0 0.0
        %609 = vmatpush.msra.mxu0 0.0
        %610 = vmatpush.msra.mxu0 0.0
        %611 = vmatpush.msra.mxu0 0.0
        %612 = vmatpush.msra.mxu0 0.0
        %613 = vmatpush.msra.mxu0 0.0
        %614 = vmatpush.msra.mxu0 0.0
        %615 = vmatpush.msra.mxu0 0.0
        %616 = vmatpush.msra.mxu0 0.0
        %617 = vmatpush.msra.mxu0 0.0
        %618 = vmatpush.msra.mxu0 0.0
        %619 = vmatpush.msra.mxu0 0.0
        %620 = vmatpush.msra.mxu0 0.0
        %621 = vmatpush.msra.mxu0 0.0
        %622 = vmatpush.msra.mxu0 %v561
        %623 = vmatpush.msra.mxu0 %v559
        %624 = vmatmul.f32.gmra.mxu0 %v568
        %v625 = vpop.f32.mrf.mxu0
        %v626 = vadd.f32 0.0, %v625
        %627 = vmatmul.f32.gmra.mxu0 %v571
        %v628 = vpop.f32.mrf.mxu0
        %v629 = vadd.f32 0.0, %v628
        %630 = vmatmul.f32.gmra.mxu0 %v574
        %v631 = vpop.f32.mrf.mxu0
        %v632 = vadd.f32 0.0, %v631
        %633 = vmatmul.f32.gmra.mxu0 %v577
        %v634 = vpop.f32.mrf.mxu0
        %v635 = vadd.f32 0.0, %v634
        %636 = vdwg.mxu0
        %v637 = vadd.f32 %v498, %v597
        %v638 = vadd.f32 %v527, %v626
        %v639 = vadd.f32 %v501, %v600
        %v640 = vadd.f32 %v530, %v629
        %v641 = vadd.f32 %v504, %v603
        %v642 = vadd.f32 %v533, %v632
        %v643 = vadd.f32 %v507, %v606
        %v644 = vadd.f32 %v536, %v635
        %645 = vrot.lane.b32.xlu0 %v335, 1
        %v646 = vpop.permute.xlu0 %645
        %647 = vrot.lane.b32.xlu0 %v337, 1
        %v648 = vpop.permute.xlu0 %647
        %649 = vrot.lane.b32.xlu0 %v336, 1
        %v650 = vpop.permute.xlu0 %649
        %651 = vrot.lane.b32.xlu0 %v338, 1
        %v652 = vpop.permute.xlu0 %651
        %vm653 = vcmp.lt.s32.totalorder %v348, 1
        %v654 = vsel %vm653, %v646, %v650
        %v655 = vsel %vm653, %v648, %v652
        %v656 = vsel %vm653, %v650, %v646
        %v657 = vsel %vm653, %v652, %v648
        %s658 = scalar_lea.vmem %s2, 6
        %v659 = vld [vmem:[%s658] sm:$0x3]
        %v661 = vperm.slane %v659, 0
        %v662 = vperm.slane %v659, 1
        %v665 = vmul.f32 %v656, %v661
        %v666 = vmul.f32 %v654, %v662
        %v667 = vmul.f32 %v657, %v661
        %v668 = vmul.f32 %v655, %v662
        %s669 = scalar_lea.vmem %s1, 96
        %v670 = vld [vmem:[%s669] sm:$0xff]
        %v671 = vld [vmem:[%s669 + $0x8] sm:$0xff]
        %v672 = vld [vmem:[%s669 + $0x10] sm:$0xff]
        %v673 = vld [vmem:[%s669 + $0x18] sm:$0xff]
        %v675 = vsel %vm397, %v670, 0
        %v678 = vsel %vm397, %v671, 0
        %v681 = vsel %vm397, %v672, 0
        %v684 = vsel %vm397, %v673, 0
        %686 = vmatpush.msra.mxu0 0.0
        %687 = vmatpush.msra.mxu0 0.0
        %688 = vmatpush.msra.mxu0 0.0
        %689 = vmatpush.msra.mxu0 0.0
        %690 = vmatpush.msra.mxu0 0.0
        %691 = vmatpush.msra.mxu0 0.0
        %692 = vmatpush.msra.mxu0 0.0
        %693 = vmatpush.msra.mxu0 0.0
        %694 = vmatpush.msra.mxu0 0.0
        %695 = vmatpush.msra.mxu0 0.0
        %696 = vmatpush.msra.mxu0 0.0
        %697 = vmatpush.msra.mxu0 0.0
        %698 = vmatpush.msra.mxu0 0.0
        %699 = vmatpush.msra.mxu0 0.0
        %700 = vmatpush.msra.mxu0 %v667
        %701 = vmatpush.msra.mxu0 %v665
        %702 = vmatmul.f32.gmra.mxu0 %v675
        %v703 = vpop.f32.mrf.mxu0
        %v704 = vadd.f32 0.0, %v703
        %705 = vmatmul.f32.gmra.mxu0 %v678
        %v706 = vpop.f32.mrf.mxu0
        %v707 = vadd.f32 0.0, %v706
        %708 = vmatmul.f32.gmra.mxu0 %v681
        %v709 = vpop.f32.mrf.mxu0
        %v710 = vadd.f32 0.0, %v709
        %711 = vmatmul.f32.gmra.mxu0 %v684
        %v712 = vpop.f32.mrf.mxu0
        %v713 = vadd.f32 0.0, %v712
        %714 = vdwg.mxu0
        %715 = vmatpush.msra.mxu0 0.0
        %716 = vmatpush.msra.mxu0 0.0
        %717 = vmatpush.msra.mxu0 0.0
        %718 = vmatpush.msra.mxu0 0.0
        %719 = vmatpush.msra.mxu0 0.0
        %720 = vmatpush.msra.mxu0 0.0
        %721 = vmatpush.msra.mxu0 0.0
        %722 = vmatpush.msra.mxu0 0.0
        %723 = vmatpush.msra.mxu0 0.0
        %724 = vmatpush.msra.mxu0 0.0
        %725 = vmatpush.msra.mxu0 0.0
        %726 = vmatpush.msra.mxu0 0.0
        %727 = vmatpush.msra.mxu0 0.0
        %728 = vmatpush.msra.mxu0 0.0
        %729 = vmatpush.msra.mxu0 %v668
        %730 = vmatpush.msra.mxu0 %v666
        %731 = vmatmul.f32.gmra.mxu0 %v675
        %v732 = vpop.f32.mrf.mxu0
        %v733 = vadd.f32 0.0, %v732
        %734 = vmatmul.f32.gmra.mxu0 %v678
        %v735 = vpop.f32.mrf.mxu0
        %v736 = vadd.f32 0.0, %v735
        %737 = vmatmul.f32.gmra.mxu0 %v681
        %v738 = vpop.f32.mrf.mxu0
        %v739 = vadd.f32 0.0, %v738
        %740 = vmatmul.f32.gmra.mxu0 %v684
        %v741 = vpop.f32.mrf.mxu0
        %v742 = vadd.f32 0.0, %v741
        %743 = vdwg.mxu0
        %v744 = vadd.f32 %v637, %v704
        %v745 = vadd.f32 %v638, %v733
        %v746 = vadd.f32 %v639, %v707
        %v747 = vadd.f32 %v640, %v736
        %v748 = vadd.f32 %v641, %v710
        %v749 = vadd.f32 %v642, %v739
        %v750 = vadd.f32 %v643, %v713
        %v751 = vadd.f32 %v644, %v742
        %s752 = scalar_lea.vmem %s1, 128
        %v753 = vld [vmem:[%s752] sm:$0xff]
        %v754 = vld [vmem:[%s752 + $0x8] sm:$0xff]
        %v755 = vld [vmem:[%s752 + $0x10] sm:$0xff]
        %v756 = vld [vmem:[%s752 + $0x18] sm:$0xff]
        %v758 = vsel %vm397, %v753, 0
        %v761 = vsel %vm397, %v754, 0
        %v764 = vsel %vm397, %v755, 0
        %v767 = vsel %vm397, %v756, 0
        %769 = vmatpush.msra.mxu0 0.0
        %770 = vmatpush.msra.mxu0 0.0
        %771 = vmatpush.msra.mxu0 0.0
        %772 = vmatpush.msra.mxu0 0.0
        %773 = vmatpush.msra.mxu0 0.0
        %774 = vmatpush.msra.mxu0 0.0
        %775 = vmatpush.msra.mxu0 0.0
        %776 = vmatpush.msra.mxu0 0.0
        %777 = vmatpush.msra.mxu0 0.0
        %778 = vmatpush.msra.mxu0 0.0
        %779 = vmatpush.msra.mxu0 0.0
        %780 = vmatpush.msra.mxu0 0.0
        %781 = vmatpush.msra.mxu0 0.0
        %782 = vmatpush.msra.mxu0 0.0
        %783 = vmatpush.msra.mxu0 %v337
        %784 = vmatpush.msra.mxu0 %v335
        %785 = vmatmul.f32.gmra.mxu0 %v758
        %v786 = vpop.f32.mrf.mxu0
        %v787 = vadd.f32 0.0, %v786
        %788 = vmatmul.f32.gmra.mxu0 %v761
        %v789 = vpop.f32.mrf.mxu0
        %v790 = vadd.f32 0.0, %v789
        %791 = vmatmul.f32.gmra.mxu0 %v764
        %v792 = vpop.f32.mrf.mxu0
        %v793 = vadd.f32 0.0, %v792
        %794 = vmatmul.f32.gmra.mxu0 %v767
        %v795 = vpop.f32.mrf.mxu0
        %v796 = vadd.f32 0.0, %v795
        %797 = vdwg.mxu0
        %798 = vmatpush.msra.mxu0 0.0
        %799 = vmatpush.msra.mxu0 0.0
        %800 = vmatpush.msra.mxu0 0.0
        %801 = vmatpush.msra.mxu0 0.0
        %802 = vmatpush.msra.mxu0 0.0
        %803 = vmatpush.msra.mxu0 0.0
        %804 = vmatpush.msra.mxu0 0.0
        %805 = vmatpush.msra.mxu0 0.0
        %806 = vmatpush.msra.mxu0 0.0
        %807 = vmatpush.msra.mxu0 0.0
        %808 = vmatpush.msra.mxu0 0.0
        %809 = vmatpush.msra.mxu0 0.0
        %810 = vmatpush.msra.mxu0 0.0
        %811 = vmatpush.msra.mxu0 0.0
        %812 = vmatpush.msra.mxu0 %v338
        %813 = vmatpush.msra.mxu0 %v336
        %814 = vmatmul.f32.gmra.mxu0 %v758
        %v815 = vpop.f32.mrf.mxu0
        %v816 = vadd.f32 0.0, %v815
        %817 = vmatmul.f32.gmra.mxu0 %v761
        %v818 = vpop.f32.mrf.mxu0
        %v819 = vadd.f32 0.0, %v818
        %820 = vmatmul.f32.gmra.mxu0 %v764
        %v821 = vpop.f32.mrf.mxu0
        %v822 = vadd.f32 0.0, %v821
        %823 = vmatmul.f32.gmra.mxu0 %v767
        %v824 = vpop.f32.mrf.mxu0
        %v825 = vadd.f32 0.0, %v824
        %826 = vdwg.mxu0
        %v827 = vadd.f32 %v744, %v787
        %v828 = vadd.f32 %v745, %v816
        %v829 = vadd.f32 %v746, %v790
        %v830 = vadd.f32 %v747, %v819
        %v831 = vadd.f32 %v748, %v793
        %v832 = vadd.f32 %v749, %v822
        %v833 = vadd.f32 %v750, %v796
        %v834 = vadd.f32 %v751, %v825
        %835 = vrot.lane.b32.xlu0 %v335, 127
        %v836 = vpop.permute.xlu0 %835
        %837 = vrot.lane.b32.xlu0 %v337, 127
        %v838 = vpop.permute.xlu0 %837
        %839 = vrot.lane.b32.xlu0 %v336, 127
        %v840 = vpop.permute.xlu0 %839
        %841 = vrot.lane.b32.xlu0 %v338, 127
        %v842 = vpop.permute.xlu0 %841
        %vm843 = vcmp.lt.s32.totalorder %v348, 127
        %v844 = vsel %vm843, %v836, %v840
        %v845 = vsel %vm843, %v838, %v842
        %v846 = vsel %vm843, %v840, %v836
        %v847 = vsel %vm843, %v842, %v838
        %s848 = scalar_lea.vmem %s2, 10
        %v849 = vld [vmem:[%s848] sm:$0x3]
        %v851 = vperm.slane %v849, 0
        %v852 = vperm.slane %v849, 1
        %v855 = vmul.f32 %v844, %v851
        %v856 = vmul.f32 %v846, %v852
        %v857 = vmul.f32 %v845, %v851
        %v858 = vmul.f32 %v847, %v852
        %s859 = scalar_lea.vmem %s1, 160
        %v860 = vld [vmem:[%s859] sm:$0xff]
        %v861 = vld [vmem:[%s859 + $0x8] sm:$0xff]
        %v862 = vld [vmem:[%s859 + $0x10] sm:$0xff]
        %v863 = vld [vmem:[%s859 + $0x18] sm:$0xff]
        %v865 = vsel %vm397, %v860, 0
        %v868 = vsel %vm397, %v861, 0
        %v871 = vsel %vm397, %v862, 0
        %v874 = vsel %vm397, %v863, 0
        %876 = vmatpush.msra.mxu0 0.0
        %877 = vmatpush.msra.mxu0 0.0
        %878 = vmatpush.msra.mxu0 0.0
        %879 = vmatpush.msra.mxu0 0.0
        %880 = vmatpush.msra.mxu0 0.0
        %881 = vmatpush.msra.mxu0 0.0
        %882 = vmatpush.msra.mxu0 0.0
        %883 = vmatpush.msra.mxu0 0.0
        %884 = vmatpush.msra.mxu0 0.0
        %885 = vmatpush.msra.mxu0 0.0
        %886 = vmatpush.msra.mxu0 0.0
        %887 = vmatpush.msra.mxu0 0.0
        %888 = vmatpush.msra.mxu0 0.0
        %889 = vmatpush.msra.mxu0 0.0
        %890 = vmatpush.msra.mxu0 %v857
        %891 = vmatpush.msra.mxu0 %v855
        %892 = vmatmul.f32.gmra.mxu0 %v865
        %v893 = vpop.f32.mrf.mxu0
        %v894 = vadd.f32 0.0, %v893
        %895 = vmatmul.f32.gmra.mxu0 %v868
        %v896 = vpop.f32.mrf.mxu0
        %v897 = vadd.f32 0.0, %v896
        %898 = vmatmul.f32.gmra.mxu0 %v871
        %v899 = vpop.f32.mrf.mxu0
        %v900 = vadd.f32 0.0, %v899
        %901 = vmatmul.f32.gmra.mxu0 %v874
        %v902 = vpop.f32.mrf.mxu0
        %v903 = vadd.f32 0.0, %v902
        %904 = vdwg.mxu0
        %905 = vmatpush.msra.mxu0 0.0
        %906 = vmatpush.msra.mxu0 0.0
        %907 = vmatpush.msra.mxu0 0.0
        %908 = vmatpush.msra.mxu0 0.0
        %909 = vmatpush.msra.mxu0 0.0
        %910 = vmatpush.msra.mxu0 0.0
        %911 = vmatpush.msra.mxu0 0.0
        %912 = vmatpush.msra.mxu0 0.0
        %913 = vmatpush.msra.mxu0 0.0
        %914 = vmatpush.msra.mxu0 0.0
        %915 = vmatpush.msra.mxu0 0.0
        %916 = vmatpush.msra.mxu0 0.0
        %917 = vmatpush.msra.mxu0 0.0
        %918 = vmatpush.msra.mxu0 0.0
        %919 = vmatpush.msra.mxu0 %v858
        %920 = vmatpush.msra.mxu0 %v856
        %921 = vmatmul.f32.gmra.mxu0 %v865
        %v922 = vpop.f32.mrf.mxu0
        %v923 = vadd.f32 0.0, %v922
        %924 = vmatmul.f32.gmra.mxu0 %v868
        %v925 = vpop.f32.mrf.mxu0
        %v926 = vadd.f32 0.0, %v925
        %927 = vmatmul.f32.gmra.mxu0 %v871
        %v928 = vpop.f32.mrf.mxu0
        %v929 = vadd.f32 0.0, %v928
        %930 = vmatmul.f32.gmra.mxu0 %v874
        %v931 = vpop.f32.mrf.mxu0
        %v932 = vadd.f32 0.0, %v931
        %933 = vdwg.mxu0
        %v934 = vadd.f32 %v827, %v894
        %v935 = vadd.f32 %v828, %v923
        %v936 = vadd.f32 %v829, %v897
        %v937 = vadd.f32 %v830, %v926
        %v938 = vadd.f32 %v831, %v900
        %v939 = vadd.f32 %v832, %v929
        %v940 = vadd.f32 %v833, %v903
        %v941 = vadd.f32 %v834, %v932
        %942 = vrot.lane.b32.xlu0 %v335, 113
        %v943 = vpop.permute.xlu0 %942
        %944 = vrot.lane.b32.xlu0 %v337, 113
        %v945 = vpop.permute.xlu0 %944
        %946 = vrot.lane.b32.xlu0 %v336, 113
        %v947 = vpop.permute.xlu0 %946
        %948 = vrot.lane.b32.xlu0 %v338, 113
        %v949 = vpop.permute.xlu0 %948
        %vm950 = vcmp.lt.s32.totalorder %v348, 113
        %v951 = vsel %vm950, %v943, %v947
        %v952 = vsel %vm950, %v945, %v949
        %v953 = vsel %vm950, %v947, %v943
        %v954 = vsel %vm950, %v949, %v945
        %s955 = scalar_lea.vmem %s2, 12
        %v956 = vld [vmem:[%s955] sm:$0x3]
        %v958 = vperm.slane %v956, 0
        %v959 = vperm.slane %v956, 1
        %v962 = vmul.f32 %v951, %v958
        %v963 = vmul.f32 %v953, %v959
        %v964 = vmul.f32 %v952, %v958
        %v965 = vmul.f32 %v954, %v959
        %s966 = scalar_lea.vmem %s1, 192
        %v967 = vld [vmem:[%s966] sm:$0xff]
        %v968 = vld [vmem:[%s966 + $0x8] sm:$0xff]
        %v969 = vld [vmem:[%s966 + $0x10] sm:$0xff]
        %v970 = vld [vmem:[%s966 + $0x18] sm:$0xff]
        %v972 = vsel %vm397, %v967, 0
        %v975 = vsel %vm397, %v968, 0
        %v978 = vsel %vm397, %v969, 0
        %v981 = vsel %vm397, %v970, 0
        %983 = vmatpush.msra.mxu0 0.0
        %984 = vmatpush.msra.mxu0 0.0
        %985 = vmatpush.msra.mxu0 0.0
        %986 = vmatpush.msra.mxu0 0.0
        %987 = vmatpush.msra.mxu0 0.0
        %988 = vmatpush.msra.mxu0 0.0
        %989 = vmatpush.msra.mxu0 0.0
        %990 = vmatpush.msra.mxu0 0.0
        %991 = vmatpush.msra.mxu0 0.0
        %992 = vmatpush.msra.mxu0 0.0
        %993 = vmatpush.msra.mxu0 0.0
        %994 = vmatpush.msra.mxu0 0.0
        %995 = vmatpush.msra.mxu0 0.0
        %996 = vmatpush.msra.mxu0 0.0
        %997 = vmatpush.msra.mxu0 %v964
        %998 = vmatpush.msra.mxu0 %v962
        %999 = vmatmul.f32.gmra.mxu0 %v972
        %v1000 = vpop.f32.mrf.mxu0
        %v1001 = vadd.f32 0.0, %v1000
        %1002 = vmatmul.f32.gmra.mxu0 %v975
        %v1003 = vpop.f32.mrf.mxu0
        %v1004 = vadd.f32 0.0, %v1003
        %1005 = vmatmul.f32.gmra.mxu0 %v978
        %v1006 = vpop.f32.mrf.mxu0
        %v1007 = vadd.f32 0.0, %v1006
        %1008 = vmatmul.f32.gmra.mxu0 %v981
        %v1009 = vpop.f32.mrf.mxu0
        %v1010 = vadd.f32 0.0, %v1009
        %1011 = vdwg.mxu0
        %1012 = vmatpush.msra.mxu0 0.0
        %1013 = vmatpush.msra.mxu0 0.0
        %1014 = vmatpush.msra.mxu0 0.0
        %1015 = vmatpush.msra.mxu0 0.0
        %1016 = vmatpush.msra.mxu0 0.0
        %1017 = vmatpush.msra.mxu0 0.0
        %1018 = vmatpush.msra.mxu0 0.0
        %1019 = vmatpush.msra.mxu0 0.0
        %1020 = vmatpush.msra.mxu0 0.0
        %1021 = vmatpush.msra.mxu0 0.0
        %1022 = vmatpush.msra.mxu0 0.0
        %1023 = vmatpush.msra.mxu0 0.0
        %1024 = vmatpush.msra.mxu0 0.0
        %1025 = vmatpush.msra.mxu0 0.0
        %1026 = vmatpush.msra.mxu0 %v965
        %1027 = vmatpush.msra.mxu0 %v963
        %1028 = vmatmul.f32.gmra.mxu0 %v972
        %v1029 = vpop.f32.mrf.mxu0
        %v1030 = vadd.f32 0.0, %v1029
        %1031 = vmatmul.f32.gmra.mxu0 %v975
        %v1032 = vpop.f32.mrf.mxu0
        %v1033 = vadd.f32 0.0, %v1032
        %1034 = vmatmul.f32.gmra.mxu0 %v978
        %v1035 = vpop.f32.mrf.mxu0
        %v1036 = vadd.f32 0.0, %v1035
        %1037 = vmatmul.f32.gmra.mxu0 %v981
        %v1038 = vpop.f32.mrf.mxu0
        %v1039 = vadd.f32 0.0, %v1038
        %1040 = vdwg.mxu0
        %v1041 = vadd.f32 %v934, %v1001
        %v1042 = vadd.f32 %v935, %v1030
        %v1043 = vadd.f32 %v936, %v1004
        %v1044 = vadd.f32 %v937, %v1033
        %v1045 = vadd.f32 %v938, %v1007
        %v1046 = vadd.f32 %v939, %v1036
        %v1047 = vadd.f32 %v940, %v1010
        %v1048 = vadd.f32 %v941, %v1039
        %1049 = vrot.lane.b32.xlu0 %v335, 112
        %v1050 = vpop.permute.xlu0 %1049
        %1051 = vrot.lane.b32.xlu0 %v337, 112
        %v1052 = vpop.permute.xlu0 %1051
        %1053 = vrot.lane.b32.xlu0 %v336, 112
        %v1054 = vpop.permute.xlu0 %1053
        %1055 = vrot.lane.b32.xlu0 %v338, 112
        %v1056 = vpop.permute.xlu0 %1055
        %vm1057 = vcmp.lt.s32.totalorder %v348, 112
        %v1058 = vsel %vm1057, %v1050, %v1054
        %v1059 = vsel %vm1057, %v1052, %v1056
        %v1060 = vsel %vm1057, %v1054, %v1050
        %v1061 = vsel %vm1057, %v1056, %v1052
        %s1062 = scalar_lea.vmem %s2, 14
        %v1063 = vld [vmem:[%s1062] sm:$0x3]
        %v1065 = vperm.slane %v1063, 0
        %v1066 = vperm.slane %v1063, 1
        %v1069 = vmul.f32 %v1058, %v1065
        %v1070 = vmul.f32 %v1060, %v1066
        %v1071 = vmul.f32 %v1059, %v1065
        %v1072 = vmul.f32 %v1061, %v1066
        %s1073 = scalar_lea.vmem %s1, 224
        %v1074 = vld [vmem:[%s1073] sm:$0xff]
        %v1075 = vld [vmem:[%s1073 + $0x8] sm:$0xff]
        %v1076 = vld [vmem:[%s1073 + $0x10] sm:$0xff]
        %v1077 = vld [vmem:[%s1073 + $0x18] sm:$0xff]
        %v1079 = vsel %vm397, %v1074, 0
        %v1082 = vsel %vm397, %v1075, 0
        %v1085 = vsel %vm397, %v1076, 0
        %v1088 = vsel %vm397, %v1077, 0
        %1090 = vmatpush.msra.mxu0 0.0
        %1091 = vmatpush.msra.mxu0 0.0
        %1092 = vmatpush.msra.mxu0 0.0
        %1093 = vmatpush.msra.mxu0 0.0
        %1094 = vmatpush.msra.mxu0 0.0
        %1095 = vmatpush.msra.mxu0 0.0
        %1096 = vmatpush.msra.mxu0 0.0
        %1097 = vmatpush.msra.mxu0 0.0
        %1098 = vmatpush.msra.mxu0 0.0
        %1099 = vmatpush.msra.mxu0 0.0
        %1100 = vmatpush.msra.mxu0 0.0
        %1101 = vmatpush.msra.mxu0 0.0
        %1102 = vmatpush.msra.mxu0 0.0
        %1103 = vmatpush.msra.mxu0 0.0
        %1104 = vmatpush.msra.mxu0 %v1071
        %1105 = vmatpush.msra.mxu0 %v1069
        %1106 = vmatmul.f32.gmra.mxu0 %v1079
        %v1107 = vpop.f32.mrf.mxu0
        %v1108 = vadd.f32 0.0, %v1107
        %1109 = vmatmul.f32.gmra.mxu0 %v1082
        %v1110 = vpop.f32.mrf.mxu0
        %v1111 = vadd.f32 0.0, %v1110
        %1112 = vmatmul.f32.gmra.mxu0 %v1085
        %v1113 = vpop.f32.mrf.mxu0
        %v1114 = vadd.f32 0.0, %v1113
        %1115 = vmatmul.f32.gmra.mxu0 %v1088
        %v1116 = vpop.f32.mrf.mxu0
        %v1117 = vadd.f32 0.0, %v1116
        %1118 = vdwg.mxu0
        %1119 = vmatpush.msra.mxu0 0.0
        %1120 = vmatpush.msra.mxu0 0.0
        %1121 = vmatpush.msra.mxu0 0.0
        %1122 = vmatpush.msra.mxu0 0.0
        %1123 = vmatpush.msra.mxu0 0.0
        %1124 = vmatpush.msra.mxu0 0.0
        %1125 = vmatpush.msra.mxu0 0.0
        %1126 = vmatpush.msra.mxu0 0.0
        %1127 = vmatpush.msra.mxu0 0.0
        %1128 = vmatpush.msra.mxu0 0.0
        %1129 = vmatpush.msra.mxu0 0.0
        %1130 = vmatpush.msra.mxu0 0.0
        %1131 = vmatpush.msra.mxu0 0.0
        %1132 = vmatpush.msra.mxu0 0.0
        %1133 = vmatpush.msra.mxu0 %v1072
        %1134 = vmatpush.msra.mxu0 %v1070
        %1135 = vmatmul.f32.gmra.mxu0 %v1079
        %v1136 = vpop.f32.mrf.mxu0
        %v1137 = vadd.f32 0.0, %v1136
        %1138 = vmatmul.f32.gmra.mxu0 %v1082
        %v1139 = vpop.f32.mrf.mxu0
        %v1140 = vadd.f32 0.0, %v1139
        %1141 = vmatmul.f32.gmra.mxu0 %v1085
        %v1142 = vpop.f32.mrf.mxu0
        %v1143 = vadd.f32 0.0, %v1142
        %1144 = vmatmul.f32.gmra.mxu0 %v1088
        %v1145 = vpop.f32.mrf.mxu0
        %v1146 = vadd.f32 0.0, %v1145
        %1147 = vdwg.mxu0
        %v1148 = vadd.f32 %v1041, %v1108
        %v1149 = vadd.f32 %v1042, %v1137
        %v1150 = vadd.f32 %v1043, %v1111
        %v1151 = vadd.f32 %v1044, %v1140
        %v1152 = vadd.f32 %v1045, %v1114
        %v1153 = vadd.f32 %v1046, %v1143
        %v1154 = vadd.f32 %v1047, %v1117
        %v1155 = vadd.f32 %v1048, %v1146
        %1156 = vrot.lane.b32.xlu0 %v335, 111
        %v1157 = vpop.permute.xlu0 %1156
        %1158 = vrot.lane.b32.xlu0 %v337, 111
        %v1159 = vpop.permute.xlu0 %1158
        %1160 = vrot.lane.b32.xlu0 %v336, 111
        %v1161 = vpop.permute.xlu0 %1160
        %1162 = vrot.lane.b32.xlu0 %v338, 111
        %v1163 = vpop.permute.xlu0 %1162
        %vm1164 = vcmp.lt.s32.totalorder %v348, 111
        %v1165 = vsel %vm1164, %v1157, %v1161
        %v1166 = vsel %vm1164, %v1159, %v1163
        %v1167 = vsel %vm1164, %v1161, %v1157
        %v1168 = vsel %vm1164, %v1163, %v1159
        %s1169 = scalar_lea.vmem %s2, 16
        %v1170 = vld [vmem:[%s1169] sm:$0x3]
        %v1172 = vperm.slane %v1170, 0
        %v1173 = vperm.slane %v1170, 1
        %v1176 = vmul.f32 %v1165, %v1172
        %v1177 = vmul.f32 %v1167, %v1173
        %v1178 = vmul.f32 %v1166, %v1172
        %v1179 = vmul.f32 %v1168, %v1173
        %s1180 = scalar_lea.vmem %s1, 256
        %v1181 = vld [vmem:[%s1180] sm:$0xff]
        %v1182 = vld [vmem:[%s1180 + $0x8] sm:$0xff]
        %v1183 = vld [vmem:[%s1180 + $0x10] sm:$0xff]
        %v1184 = vld [vmem:[%s1180 + $0x18] sm:$0xff]
        %v1186 = vsel %vm397, %v1181, 0
        %v1189 = vsel %vm397, %v1182, 0
        %v1192 = vsel %vm397, %v1183, 0
        %v1195 = vsel %vm397, %v1184, 0
        %1197 = vmatpush.msra.mxu0 0.0
        %1198 = vmatpush.msra.mxu0 0.0
        %1199 = vmatpush.msra.mxu0 0.0
        %1200 = vmatpush.msra.mxu0 0.0
        %1201 = vmatpush.msra.mxu0 0.0
        %1202 = vmatpush.msra.mxu0 0.0
        %1203 = vmatpush.msra.mxu0 0.0
        %1204 = vmatpush.msra.mxu0 0.0
        %1205 = vmatpush.msra.mxu0 0.0
        %1206 = vmatpush.msra.mxu0 0.0
        %1207 = vmatpush.msra.mxu0 0.0
        %1208 = vmatpush.msra.mxu0 0.0
        %1209 = vmatpush.msra.mxu0 0.0
        %1210 = vmatpush.msra.mxu0 0.0
        %1211 = vmatpush.msra.mxu0 %v1178
        %1212 = vmatpush.msra.mxu0 %v1176
        %1213 = vmatmul.f32.gmra.mxu0 %v1186
        %v1214 = vpop.f32.mrf.mxu0
        %v1215 = vadd.f32 0.0, %v1214
        %1216 = vmatmul.f32.gmra.mxu0 %v1189
        %v1217 = vpop.f32.mrf.mxu0
        %v1218 = vadd.f32 0.0, %v1217
        %1219 = vmatmul.f32.gmra.mxu0 %v1192
        %v1220 = vpop.f32.mrf.mxu0
        %v1221 = vadd.f32 0.0, %v1220
        %1222 = vmatmul.f32.gmra.mxu0 %v1195
        %v1223 = vpop.f32.mrf.mxu0
        %v1224 = vadd.f32 0.0, %v1223
        %1225 = vdwg.mxu0
        %1226 = vmatpush.msra.mxu0 0.0
        %1227 = vmatpush.msra.mxu0 0.0
        %1228 = vmatpush.msra.mxu0 0.0
        %1229 = vmatpush.msra.mxu0 0.0
        %1230 = vmatpush.msra.mxu0 0.0
        %1231 = vmatpush.msra.mxu0 0.0
        %1232 = vmatpush.msra.mxu0 0.0
        %1233 = vmatpush.msra.mxu0 0.0
        %1234 = vmatpush.msra.mxu0 0.0
        %1235 = vmatpush.msra.mxu0 0.0
        %1236 = vmatpush.msra.mxu0 0.0
        %1237 = vmatpush.msra.mxu0 0.0
        %1238 = vmatpush.msra.mxu0 0.0
        %1239 = vmatpush.msra.mxu0 0.0
        %1240 = vmatpush.msra.mxu0 %v1179
        %1241 = vmatpush.msra.mxu0 %v1177
        %1242 = vmatmul.f32.gmra.mxu0 %v1186
        %v1243 = vpop.f32.mrf.mxu0
        %v1244 = vadd.f32 0.0, %v1243
        %1245 = vmatmul.f32.gmra.mxu0 %v1189
        %v1246 = vpop.f32.mrf.mxu0
        %v1247 = vadd.f32 0.0, %v1246
        %1248 = vmatmul.f32.gmra.mxu0 %v1192
        %v1249 = vpop.f32.mrf.mxu0
        %v1250 = vadd.f32 0.0, %v1249
        %1251 = vmatmul.f32.gmra.mxu0 %v1195
        %v1252 = vpop.f32.mrf.mxu0
        %v1253 = vadd.f32 0.0, %v1252
        %1254 = vdwg.mxu0
        %v1255 = vadd.f32 %v1148, %v1215
        %v1256 = vadd.f32 %v1149, %v1244
        %v1257 = vadd.f32 %v1150, %v1218
        %v1258 = vadd.f32 %v1151, %v1247
        %v1259 = vadd.f32 %v1152, %v1221
        %v1260 = vadd.f32 %v1153, %v1250
        %v1261 = vadd.f32 %v1154, %v1224
        %v1262 = vadd.f32 %v1155, %v1253
        %v1263 = vld [vmem:[%s334] sm:$0xff]
        %v1264 = vld [vmem:[%s334 + $0x8] sm:$0xff]
        %v1265 = vld [vmem:[%s4] sm:$0xff]
        %v1266 = vld [vmem:[%s4 + $0x8] sm:$0xff]
        %v1267 = vmul.f32 %v1263, %v1265
        %v1268 = vmul.f32 %v1264, %v1266
        %v1269 = vadd.f32 %v1255, %v1267
        %v1270 = vadd.f32 %v1256, %v1268
        %v1271 = vld [vmem:[%s5] sm:$0xff]
        %v1272 = vld [vmem:[%s5 + $0x8] sm:$0xff]
        %v1273 = vmul.f32 %v1263, %v1271
        %v1274 = vmul.f32 %v1264, %v1272
        %v1275 = vadd.f32 %v1257, %v1273
        %v1276 = vadd.f32 %v1258, %v1274
        %v1277 = vxor.u32 %v1269, 2147483648
        %v1278 = vxor.u32 %v1270, 2147483648
        %v1279 = vmul.f32 %v1277, 1.442695
        %v1280 = vpow.pop %v1279
        %v1281 = vmul.f32 %v1278, 1.442695
        %v1282 = vpow.pop %v1281
        %v1283 = vadd.f32 %v1280, 1.0
        %v1284 = vadd.f32 %v1282, 1.0
        %v1285 = vrcp.pop %v1283
        %v1286 = vmul.f32 %v1283, %v1285
        %v1287 = vsub.f32 1.0, %v1286
        %v1288 = vmul.f32 %v1285, %v1287
        %v1289 = vadd.f32 %v1285, %v1288
        %vm1290 = vweird.f32 %v1283
        %vm1291 = vweird.f32 %v1285
        %vm1292 = vmor %vm1290, %vm1291
        %v1293 = vsel %vm1292, %v1285, %v1289
        %v1294 = vand.u32 2147483647, %v1283
        %vm1295 = vcmp.eq.f32.partialorder %v1294, 8.507059e+37
        %v1296 = vand.u32 %v1283, 2147483648
        %v1297 = vor.u32 1.1754944e-38, %v1296
        %v1298 = vsel %vm1295, %v1297, %v1293
        %v1299 = vmul.f32 1.0, %v1298
        %v1300 = vrcp.pop %v1284
        %v1301 = vmul.f32 %v1284, %v1300
        %v1302 = vsub.f32 1.0, %v1301
        %v1303 = vmul.f32 %v1300, %v1302
        %v1304 = vadd.f32 %v1300, %v1303
        %vm1305 = vweird.f32 %v1284
        %vm1306 = vweird.f32 %v1300
        %vm1307 = vmor %vm1305, %vm1306
        %v1308 = vsel %vm1307, %v1300, %v1304
        %v1309 = vand.u32 2147483647, %v1284
        %vm1310 = vcmp.eq.f32.partialorder %v1309, 8.507059e+37
        %v1311 = vand.u32 %v1284, 2147483648
        %v1312 = vor.u32 1.1754944e-38, %v1311
        %v1313 = vsel %vm1310, %v1312, %v1308
        %v1314 = vmul.f32 1.0, %v1313
        %v1315 = vxor.u32 %v1275, 2147483648
        %v1316 = vxor.u32 %v1276, 2147483648
        %v1317 = vmul.f32 %v1315, 1.442695
        %v1318 = vpow.pop %v1317
        %v1319 = vmul.f32 %v1316, 1.442695
        %v1320 = vpow.pop %v1319
        %v1321 = vadd.f32 %v1318, 1.0
        %v1322 = vadd.f32 %v1320, 1.0
        %v1323 = vrcp.pop %v1321
        %v1324 = vmul.f32 %v1321, %v1323
        %v1325 = vsub.f32 1.0, %v1324
        %v1326 = vmul.f32 %v1323, %v1325
        %v1327 = vadd.f32 %v1323, %v1326
        %vm1328 = vweird.f32 %v1321
        %vm1329 = vweird.f32 %v1323
        %vm1330 = vmor %vm1328, %vm1329
        %v1331 = vsel %vm1330, %v1323, %v1327
        %v1332 = vand.u32 2147483647, %v1321
        %vm1333 = vcmp.eq.f32.partialorder %v1332, 8.507059e+37
        %v1334 = vand.u32 %v1321, 2147483648
        %v1335 = vor.u32 1.1754944e-38, %v1334
        %v1336 = vsel %vm1333, %v1335, %v1331
        %v1337 = vmul.f32 1.0, %v1336
        %v1338 = vrcp.pop %v1322
        %v1339 = vmul.f32 %v1322, %v1338
        %v1340 = vsub.f32 1.0, %v1339
        %v1341 = vmul.f32 %v1338, %v1340
        %v1342 = vadd.f32 %v1338, %v1341
        %vm1343 = vweird.f32 %v1322
        %vm1344 = vweird.f32 %v1338
        %vm1345 = vmor %vm1343, %vm1344
        %v1346 = vsel %vm1345, %v1338, %v1342
        %v1347 = vand.u32 2147483647, %v1322
        %vm1348 = vcmp.eq.f32.partialorder %v1347, 8.507059e+37
        %v1349 = vand.u32 %v1322, 2147483648
        %v1350 = vor.u32 1.1754944e-38, %v1349
        %v1351 = vsel %vm1348, %v1350, %v1346
        %v1352 = vmul.f32 1.0, %v1351
        %v1353 = vmul.f32 %v1337, %v1263
        %v1354 = vmul.f32 %v1352, %v1264
        %v1355 = vtanh.pop %v1259
        %v1356 = vtanh.pop %v1260
        %v1357 = vmul.f32 %v1299, %v1355
        %v1358 = vmul.f32 %v1314, %v1356
        %v1359 = vadd.f32 %v1353, %v1357
        %v1360 = vadd.f32 %v1354, %v1358
        %v1361 = vld [vmem:[%s6] sm:$0xff]
        %v1362 = vld [vmem:[%s6 + $0x8] sm:$0xff]
        %v1363 = vmul.f32 %v1359, %v1361
        %v1364 = vmul.f32 %v1360, %v1362
        %v1365 = vadd.f32 %v1261, %v1363
        %v1366 = vadd.f32 %v1262, %v1364
        %v1367 = vxor.u32 %v1365, 2147483648
        %v1368 = vxor.u32 %v1366, 2147483648
        %v1369 = vmul.f32 %v1367, 1.442695
        %v1370 = vpow.pop %v1369
        %v1371 = vmul.f32 %v1368, 1.442695
        %v1372 = vpow.pop %v1371
        %v1373 = vadd.f32 %v1370, 1.0
        %v1374 = vadd.f32 %v1372, 1.0
        %v1375 = vrcp.pop %v1373
        %v1376 = vmul.f32 %v1373, %v1375
        %v1377 = vsub.f32 1.0, %v1376
        %v1378 = vmul.f32 %v1375, %v1377
        %v1379 = vadd.f32 %v1375, %v1378
        %vm1380 = vweird.f32 %v1373
        %vm1381 = vweird.f32 %v1375
        %vm1382 = vmor %vm1380, %vm1381
        %v1383 = vsel %vm1382, %v1375, %v1379
        %v1384 = vand.u32 2147483647, %v1373
        %vm1385 = vcmp.eq.f32.partialorder %v1384, 8.507059e+37
        %v1386 = vand.u32 %v1373, 2147483648
        %v1387 = vor.u32 1.1754944e-38, %v1386
        %v1388 = vsel %vm1385, %v1387, %v1383
        %v1389 = vmul.f32 1.0, %v1388
        %v1390 = vrcp.pop %v1374
        %v1391 = vmul.f32 %v1374, %v1390
        %v1392 = vsub.f32 1.0, %v1391
        %v1393 = vmul.f32 %v1390, %v1392
        %v1394 = vadd.f32 %v1390, %v1393
        %vm1395 = vweird.f32 %v1374
        %vm1396 = vweird.f32 %v1390
        %vm1397 = vmor %vm1395, %vm1396
        %v1398 = vsel %vm1397, %v1390, %v1394
        %v1399 = vand.u32 2147483647, %v1374
        %vm1400 = vcmp.eq.f32.partialorder %v1399, 8.507059e+37
        %v1401 = vand.u32 %v1374, 2147483648
        %v1402 = vor.u32 1.1754944e-38, %v1401
        %v1403 = vsel %vm1400, %v1402, %v1398
        %v1404 = vmul.f32 1.0, %v1403
        %v1405 = vtanh.pop %v1359
        %v1406 = vtanh.pop %v1360
        %v1407 = vmul.f32 %v1389, %v1405
        %v1408 = vmul.f32 %v1404, %v1406
        %1409 = vst [vmem:[%s317] sm:$0xff] %v1407
        %1410 = vst [vmem:[%s317 + $0x8] sm:$0xff] %v1408
        %1411 = vst [vmem:[%s324] sm:$0xff] %v1359
        %1412 = vst [vmem:[%s324 + $0x8] sm:$0xff] %v1360
        %s1413 = sand.u32 %s191, 1
        %s1414 = scalar_lea.sflag [#allocation3], %s1413
        %s1415 = sand.u32 %s191, 1
        %s1416 = smul.addr %s1415, 16
        %s1417 = scalar_lea.vmem [#allocation2], %s1416
        %s1418 = sand.u32 %s217, 1
        %s1419 = scalar_lea.sflag [#allocation5], %s1418
        %s1420 = sand.u32 %s217, 1
        %s1421 = smul.addr %s1420, 16
        %s1422 = scalar_lea.vmem [#allocation4], %s1421
        // Predicated region
        $region49: #{tpu_custom_call.1} parent=47 // pred_check
          %p1423 = pneg %p201
        $region50: #{tpu_custom_call.1} parent=47 // pred_check_branch
          %1425 = sbr.rel (%p1423) target = $region52
        $region51: #{tpu_custom_call.1} parent=47 // pred_region
          %1427 = vsyncadd %s1414, 0
          %s1428 = smul.addr %s26, 2
          %s1429 = smul.addr %s1428, 8
          %s1430 = scalar_lea.hbm %s7, %s1429
          %s1432 = sshll.u32 %s1417, 4
          %s1433 = int_to_ptr.vmem [resolvable:$true] %s1432
          %s1434 = sshll.u32 %s1430, 4
          %s1435 = int_to_ptr.hbm [resolvable:$true] %s1434
          %1437 = dma.vmem_to_hbm [thread:$0]  %s1433, 256, %s1435, %s1414
        $region52: #{tpu_custom_call.1} parent=47 // pred_fallthru
          _
        // Predicated region
        $region53: #{tpu_custom_call.1} parent=47 // pred_check
          %p1438 = pneg %p227
        $region54: #{tpu_custom_call.1} parent=47 // pred_check_branch
          %1440 = sbr.rel (%p1438) target = $region56
        $region55: #{tpu_custom_call.1} parent=47 // pred_region
          %1442 = vsyncadd %s1419, 0
          %s1443 = smul.addr %s26, 2
          %s1444 = smul.addr %s1443, 8
          %s1445 = scalar_lea.hbm %s8, %s1444
          %s1447 = sshll.u32 %s1422, 4
          %s1448 = int_to_ptr.vmem [resolvable:$true] %s1447
          %s1449 = sshll.u32 %s1445, 4
          %s1450 = int_to_ptr.hbm [resolvable:$true] %s1449
          %1452 = dma.vmem_to_hbm [thread:$0]  %s1448, 256, %s1450, %s1419
        $region56: #{tpu_custom_call.1} parent=47 // pred_fallthru
          _
      $region48: #{tpu_custom_call.1} parent=5 // pred_fallthru
        _
      %p1453 = scmp.le.s32.totalorder 2, %s21
      // Predicated region
      $region57: #{tpu_custom_call.1} parent=5 // pred_check
        %p1454 = pneg %p1453
      $region58: #{tpu_custom_call.1} parent=5 // pred_check_branch
        %1456 = sbr.rel (%p1454) target = $region60
      $region59: #{tpu_custom_call.1} parent=5 // pred_region
        %s1457 = ssub.s32 %s21, 2
        // Predicated region
        $region61: #{tpu_custom_call.1} parent=59 // pred_check
          %p1458 = pneg %p207
        $region62: #{tpu_custom_call.1} parent=59 // pred_check_branch
          %1460 = sbr.rel (%p1458) target = $region64
        $region63: #{tpu_custom_call.1} parent=59 // pred_region
          %s1461 = sand.u32 %s192, 1
          %s1462 = scalar_lea.sflag [#allocation3], %s1461
          %s1463 = sand.u32 %s192, 1
          %s1464 = smul.addr %s1463, 16
          %s1465 = scalar_lea.vmem [#allocation2], %s1464
          %1467 = dma.done %s1462, 256
        $region64: #{tpu_custom_call.1} parent=59 // pred_fallthru
          _
        // Predicated region
        $region65: #{tpu_custom_call.1} parent=59 // pred_check
          %p1468 = pneg %p233
        $region66: #{tpu_custom_call.1} parent=59 // pred_check_branch
          %1470 = sbr.rel (%p1468) target = $region68
        $region67: #{tpu_custom_call.1} parent=59 // pred_region
          %s1471 = sand.u32 %s218, 1
          %s1472 = scalar_lea.sflag [#allocation5], %s1471
          %s1473 = sand.u32 %s218, 1
          %s1474 = smul.addr %s1473, 16
          %s1475 = scalar_lea.vmem [#allocation4], %s1474
          %1477 = dma.done %s1472, 256
        $region68: #{tpu_custom_call.1} parent=59 // pred_fallthru
          _
      $region60: #{tpu_custom_call.1} parent=5 // pred_fallthru
        _
    $region6: #{tpu_custom_call.1} parent=1 // loop_footer
      %s25 = sadd.s32 1, %s21
    $region7: #{tpu_custom_call.1} parent=1 // loop_footer_branch
      %20 = sbr.rel target = $region3
    $region8: #{tpu_custom_call.1} parent=1 // loop_exit
      _
    %1478 = vsyncpa [#allocation3], 1
    %s1479 = scalar_lea.sflag [#allocation3], 1
    %1480 = vsyncpa %s1479, 1
    %1481 = vsyncpa [#allocation5], 1
    %s1482 = scalar_lea.sflag [#allocation5], 1
    %1483 = vsyncpa %s1482, 1

</llo_original>
